<compile_context>
chip_gen: v5e
topology: v5e:2x2
jax: 0.10.0
libtpu: 0.0.40
codegen_flags: <defaults>
</compile_context>

<pallas_src>
import functools

import jax
import jax.numpy as jnp
from jax.experimental import pallas as pl
from jax.experimental.pallas import tpu as pltpu

INPUT_DIM = 3
HIDDEN_DIM = 60
OUTPUT_DIM = 1
N_LAYERS = 7  # 6 hidden (tanh) + 1 linear output

# Padded (sublane-aligned) feature dims used inside the kernel.
IN_PAD = 8
HID_PAD = 64
OUT_PAD = 8
LOGICAL_DIMS = [INPUT_DIM] + [HIDDEN_DIM] * (N_LAYERS - 1) + [OUTPUT_DIM]
PAD_DIMS = [IN_PAD] + [HID_PAD] * (N_LAYERS - 1) + [OUT_PAD]


def mlp_kernel(x_ref, *refs):
    # refs = w1, b1, w2, b2, ..., w7, b7, o_ref ; activations are (features, tile_n).
    o_ref = refs[-1]
    param_refs = refs[:-1]
    h = x_ref[...].astype(jnp.float32)              # (IN_PAD, tile_n), batch on lanes
    for layer in range(N_LAYERS):
        w = param_refs[2 * layer][...]              # bf16 (out_pad, in_pad)
        b = param_refs[2 * layer + 1][...]          # f32  (out_pad, 1) -> lane broadcast
        h = jnp.dot(w, h.astype(jnp.bfloat16),
                    preferred_element_type=jnp.float32) + b
        if layer < N_LAYERS - 1:
            h = jnp.tanh(h)                         # f32 tanh (no bf16 VPU/EUP on v5e)
    o_ref[...] = h.astype(o_ref.dtype)              # lane-dense (OUT_PAD, tile_n) store


def make_params(key):
    """Xavier-uniform weights in PyTorch (out, in) layout, zero biases.

    Returns (logical_params, padded_params):
      logical_params: list of (w, b) f32 pairs matching the PyTorch module.
      padded_params : flat [w1, b1, ..., w7, b7] with zero-padded feature dims;
                      weights cast to bf16 for the MXU, biases kept f32 (out_pad, 1).
    """
    logical, padded = [], []
    for i in range(N_LAYERS):
        fan_in, fan_out = LOGICAL_DIMS[i], LOGICAL_DIMS[i + 1]
        key, sub = jax.random.split(key)
        bound = (6.0 / (fan_in + fan_out)) ** 0.5
        w = jax.random.uniform(sub, (fan_out, fan_in), jnp.float32, -bound, bound)
        b = jnp.zeros((fan_out,), jnp.float32)
        logical.append((w, b))

        ip, op = PAD_DIMS[i], PAD_DIMS[i + 1]
        w_pad = jnp.zeros((op, ip), jnp.float32).at[:fan_out, :fan_in].set(w)
        b_pad = jnp.zeros((op, 1), jnp.float32).at[:fan_out, 0].set(b)
        padded.append(w_pad.astype(jnp.bfloat16))
        padded.append(b_pad)
    return logical, padded


@functools.partial(jax.jit, static_argnames=("tile_n",))
def neural_network_forward(x, padded_params, tile_n=256):
    """x: (N, INPUT_DIM) f32 -> (N, OUTPUT_DIM) f32."""
    n = x.shape[0]
    n_pad = ((n + tile_n - 1) // tile_n) * tile_n

    # Lane-dense, zero-padded transposed input: (IN_PAD, n_pad), batch on lanes.
    xt = jnp.zeros((IN_PAD, n_pad), jnp.float32)
    xt = xt.at[:INPUT_DIM, :n].set(x.T)

    grid = (n_pad // tile_n,)
    x_spec = pl.BlockSpec((IN_PAD, tile_n), lambda i: (0, i))
    # Whole (padded) parameter blocks; constant block index -> Mosaic skips re-DMA.
    param_specs = [pl.BlockSpec(p.shape, lambda i: (0, 0)) for p in padded_params]
    out_spec = pl.BlockSpec((OUT_PAD, tile_n), lambda i: (0, i))

    out_t = pl.pallas_call(
        mlp_kernel,
        out_shape=jax.ShapeDtypeStruct((OUT_PAD, n_pad), jnp.float32),
        grid_spec=pltpu.PrefetchScalarGridSpec(
            num_scalar_prefetch=0,
            grid=grid,
            in_specs=[x_spec] + param_specs,
            out_specs=out_spec,
        ),
        compiler_params=pltpu.CompilerParams(
            dimension_semantics=("parallel",),  # shards batch tiles across v7x's 2 TCs
        ),
    )(xt, *padded_params)

    return out_t[:OUTPUT_DIM, :n].T  # back to (N, OUTPUT_DIM)


def reference_forward(x, logical_params):
    h = x
    for layer, (w, b) in enumerate(logical_params):
        h = h @ w.T + b
        if layer < N_LAYERS - 1:
            h = jnp.tanh(h)
    return h


if __name__ == "__main__":
    key = jax.random.PRNGKey(0)
    key_p, key_x = jax.random.split(key)
    logical_params, padded_params = make_params(key_p)

    batch = 300  # deliberately not a multiple of the tile; wrapper zero-pads to 512
    x = jax.random.normal(key_x, (batch, INPUT_DIM), jnp.float32)

    out = neural_network_forward(x, padded_params, tile_n=256)
    out = jax.block_until_ready(out)

    ref = reference_forward(x, logical_params)
    assert out.shape == (batch, OUTPUT_DIM)
    # bf16 MXU operands (f32 accumulation) -> loosened tolerance vs the f32 reference.
    assert jnp.allclose(out, ref, atol=5e-2, rtol=5e-2), "mismatch vs reference"

    print("KERNEL_OK")
</pallas_src>

<mosaic_0001>
module attributes {stable_mosaic.version = 11 : i64} {
  func.func @mlp_kernel(%arg0: i32, %arg1: memref<8x256xf32, #tpu.memory_space<vmem>>, %arg2: memref<64x8xbf16, #tpu.memory_space<vmem>>, %arg3: memref<64x1xf32, #tpu.memory_space<vmem>>, %arg4: memref<64x64xbf16, #tpu.memory_space<vmem>>, %arg5: memref<64x1xf32, #tpu.memory_space<vmem>>, %arg6: memref<64x64xbf16, #tpu.memory_space<vmem>>, %arg7: memref<64x1xf32, #tpu.memory_space<vmem>>, %arg8: memref<64x64xbf16, #tpu.memory_space<vmem>>, %arg9: memref<64x1xf32, #tpu.memory_space<vmem>>, %arg10: memref<64x64xbf16, #tpu.memory_space<vmem>>, %arg11: memref<64x1xf32, #tpu.memory_space<vmem>>, %arg12: memref<64x64xbf16, #tpu.memory_space<vmem>>, %arg13: memref<64x1xf32, #tpu.memory_space<vmem>>, %arg14: memref<8x64xbf16, #tpu.memory_space<vmem>>, %arg15: memref<8x1xf32, #tpu.memory_space<vmem>>, %arg16: memref<8x256xf32, #tpu.memory_space<vmem>>) attributes {dimension_semantics = [#tpu.dimension_semantics<parallel>], iteration_bounds = array<i64: 2>, scalar_prefetch = 0 : i64, scratch_operands = 0 : i64, tpu.core_type = #tpu.core_type<tc>, window_params = [{transform_indices = @transform_0, window_bounds = array<i64: 8, 256>}, {pipeline_mode = #tpu.pipeline_mode<synchronous>, transform_indices = @transform_1, window_bounds = array<i64: 64, 8>}, {pipeline_mode = #tpu.pipeline_mode<synchronous>, transform_indices = @transform_2, window_bounds = array<i64: 64, 1>}, {pipeline_mode = #tpu.pipeline_mode<synchronous>, transform_indices = @transform_3, window_bounds = array<i64: 64, 64>}, {pipeline_mode = #tpu.pipeline_mode<synchronous>, transform_indices = @transform_4, window_bounds = array<i64: 64, 1>}, {pipeline_mode = #tpu.pipeline_mode<synchronous>, transform_indices = @transform_5, window_bounds = array<i64: 64, 64>}, {pipeline_mode = #tpu.pipeline_mode<synchronous>, transform_indices = @transform_6, window_bounds = array<i64: 64, 1>}, {pipeline_mode = #tpu.pipeline_mode<synchronous>, transform_indices = @transform_7, window_bounds = array<i64: 64, 64>}, {pipeline_mode = #tpu.pipeline_mode<synchronous>, transform_indices = @transform_8, window_bounds = array<i64: 64, 1>}, {pipeline_mode = #tpu.pipeline_mode<synchronous>, transform_indices = @transform_9, window_bounds = array<i64: 64, 64>}, {pipeline_mode = #tpu.pipeline_mode<synchronous>, transform_indices = @transform_10, window_bounds = array<i64: 64, 1>}, {pipeline_mode = #tpu.pipeline_mode<synchronous>, transform_indices = @transform_11, window_bounds = array<i64: 64, 64>}, {pipeline_mode = #tpu.pipeline_mode<synchronous>, transform_indices = @transform_12, window_bounds = array<i64: 64, 1>}, {pipeline_mode = #tpu.pipeline_mode<synchronous>, transform_indices = @transform_13, window_bounds = array<i64: 8, 64>}, {pipeline_mode = #tpu.pipeline_mode<synchronous>, transform_indices = @transform_14, window_bounds = array<i64: 8, 1>}, {transform_indices = @transform_15, window_bounds = array<i64: 8, 256>}]} {
    %c0 = arith.constant 0 : index
    %c0_0 = arith.constant 0 : index
    %0 = vector.load %arg1[%c0, %c0_0] : memref<8x256xf32, #tpu.memory_space<vmem>>, vector<8x256xf32>
    %c0_1 = arith.constant 0 : index
    %c0_2 = arith.constant 0 : index
    %1 = vector.load %arg2[%c0_1, %c0_2] : memref<64x8xbf16, #tpu.memory_space<vmem>>, vector<64x8xbf16>
    %c0_3 = arith.constant 0 : index
    %c0_4 = arith.constant 0 : index
    %2 = vector.load %arg3[%c0_3, %c0_4] : memref<64x1xf32, #tpu.memory_space<vmem>>, vector<64x1xf32>
    %3 = arith.truncf %0 : vector<8x256xf32> to vector<8x256xbf16>
    %cst = arith.constant dense<0.000000e+00> : vector<64x256xf32>
    %4 = tpu.matmul %1, %3, %cst {dimension_numbers = #tpu.dot_dimension_numbers<[1], [0], [0], [1], [0, 0, 1, 1], [], []>} : vector<64x8xbf16>, vector<8x256xbf16>, vector<64x256xf32> -> vector<64x256xf32>
    %5 = vector.broadcast %2 : vector<64x1xf32> to vector<64x256xf32>
    %6 = arith.addf %4, %5 : vector<64x256xf32>
    %7 = math.tanh %6 : vector<64x256xf32>
    %c0_5 = arith.constant 0 : index
    %c0_6 = arith.constant 0 : index
    %8 = vector.load %arg4[%c0_5, %c0_6] : memref<64x64xbf16, #tpu.memory_space<vmem>>, vector<64x64xbf16>
    %c0_7 = arith.constant 0 : index
    %c0_8 = arith.constant 0 : index
    %9 = vector.load %arg5[%c0_7, %c0_8] : memref<64x1xf32, #tpu.memory_space<vmem>>, vector<64x1xf32>
    %10 = arith.truncf %7 : vector<64x256xf32> to vector<64x256xbf16>
    %cst_9 = arith.constant dense<0.000000e+00> : vector<64x256xf32>
    %11 = tpu.matmul %8, %10, %cst_9 {dimension_numbers = #tpu.dot_dimension_numbers<[1], [0], [0], [1], [0, 0, 1, 1], [], []>} : vector<64x64xbf16>, vector<64x256xbf16>, vector<64x256xf32> -> vector<64x256xf32>
    %12 = vector.broadcast %9 : vector<64x1xf32> to vector<64x256xf32>
    %13 = arith.addf %11, %12 : vector<64x256xf32>
    %14 = math.tanh %13 : vector<64x256xf32>
    %c0_10 = arith.constant 0 : index
    %c0_11 = arith.constant 0 : index
    %15 = vector.load %arg6[%c0_10, %c0_11] : memref<64x64xbf16, #tpu.memory_space<vmem>>, vector<64x64xbf16>
    %c0_12 = arith.constant 0 : index
    %c0_13 = arith.constant 0 : index
    %16 = vector.load %arg7[%c0_12, %c0_13] : memref<64x1xf32, #tpu.memory_space<vmem>>, vector<64x1xf32>
    %17 = arith.truncf %14 : vector<64x256xf32> to vector<64x256xbf16>
    %cst_14 = arith.constant dense<0.000000e+00> : vector<64x256xf32>
    %18 = tpu.matmul %15, %17, %cst_14 {dimension_numbers = #tpu.dot_dimension_numbers<[1], [0], [0], [1], [0, 0, 1, 1], [], []>} : vector<64x64xbf16>, vector<64x256xbf16>, vector<64x256xf32> -> vector<64x256xf32>
    %19 = vector.broadcast %16 : vector<64x1xf32> to vector<64x256xf32>
    %20 = arith.addf %18, %19 : vector<64x256xf32>
    %21 = math.tanh %20 : vector<64x256xf32>
    %c0_15 = arith.constant 0 : index
    %c0_16 = arith.constant 0 : index
    %22 = vector.load %arg8[%c0_15, %c0_16] : memref<64x64xbf16, #tpu.memory_space<vmem>>, vector<64x64xbf16>
    %c0_17 = arith.constant 0 : index
    %c0_18 = arith.constant 0 : index
    %23 = vector.load %arg9[%c0_17, %c0_18] : memref<64x1xf32, #tpu.memory_space<vmem>>, vector<64x1xf32>
    %24 = arith.truncf %21 : vector<64x256xf32> to vector<64x256xbf16>
    %cst_19 = arith.constant dense<0.000000e+00> : vector<64x256xf32>
    %25 = tpu.matmul %22, %24, %cst_19 {dimension_numbers = #tpu.dot_dimension_numbers<[1], [0], [0], [1], [0, 0, 1, 1], [], []>} : vector<64x64xbf16>, vector<64x256xbf16>, vector<64x256xf32> -> vector<64x256xf32>
    %26 = vector.broadcast %23 : vector<64x1xf32> to vector<64x256xf32>
    %27 = arith.addf %25, %26 : vector<64x256xf32>
    %28 = math.tanh %27 : vector<64x256xf32>
    %c0_20 = arith.constant 0 : index
    %c0_21 = arith.constant 0 : index
    %29 = vector.load %arg10[%c0_20, %c0_21] : memref<64x64xbf16, #tpu.memory_space<vmem>>, vector<64x64xbf16>
    %c0_22 = arith.constant 0 : index
    %c0_23 = arith.constant 0 : index
    %30 = vector.load %arg11[%c0_22, %c0_23] : memref<64x1xf32, #tpu.memory_space<vmem>>, vector<64x1xf32>
    %31 = arith.truncf %28 : vector<64x256xf32> to vector<64x256xbf16>
    %cst_24 = arith.constant dense<0.000000e+00> : vector<64x256xf32>
    %32 = tpu.matmul %29, %31, %cst_24 {dimension_numbers = #tpu.dot_dimension_numbers<[1], [0], [0], [1], [0, 0, 1, 1], [], []>} : vector<64x64xbf16>, vector<64x256xbf16>, vector<64x256xf32> -> vector<64x256xf32>
    %33 = vector.broadcast %30 : vector<64x1xf32> to vector<64x256xf32>
    %34 = arith.addf %32, %33 : vector<64x256xf32>
    %35 = math.tanh %34 : vector<64x256xf32>
    %c0_25 = arith.constant 0 : index
    %c0_26 = arith.constant 0 : index
    %36 = vector.load %arg12[%c0_25, %c0_26] : memref<64x64xbf16, #tpu.memory_space<vmem>>, vector<64x64xbf16>
    %c0_27 = arith.constant 0 : index
    %c0_28 = arith.constant 0 : index
    %37 = vector.load %arg13[%c0_27, %c0_28] : memref<64x1xf32, #tpu.memory_space<vmem>>, vector<64x1xf32>
    %38 = arith.truncf %35 : vector<64x256xf32> to vector<64x256xbf16>
    %cst_29 = arith.constant dense<0.000000e+00> : vector<64x256xf32>
    %39 = tpu.matmul %36, %38, %cst_29 {dimension_numbers = #tpu.dot_dimension_numbers<[1], [0], [0], [1], [0, 0, 1, 1], [], []>} : vector<64x64xbf16>, vector<64x256xbf16>, vector<64x256xf32> -> vector<64x256xf32>
    %40 = vector.broadcast %37 : vector<64x1xf32> to vector<64x256xf32>
    %41 = arith.addf %39, %40 : vector<64x256xf32>
    %42 = math.tanh %41 : vector<64x256xf32>
    %c0_30 = arith.constant 0 : index
    %c0_31 = arith.constant 0 : index
    %43 = vector.load %arg14[%c0_30, %c0_31] : memref<8x64xbf16, #tpu.memory_space<vmem>>, vector<8x64xbf16>
    %c0_32 = arith.constant 0 : index
    %c0_33 = arith.constant 0 : index
    %44 = vector.load %arg15[%c0_32, %c0_33] : memref<8x1xf32, #tpu.memory_space<vmem>>, vector<8x1xf32>
    %45 = arith.truncf %42 : vector<64x256xf32> to vector<64x256xbf16>
    %cst_34 = arith.constant dense<0.000000e+00> : vector<8x256xf32>
    %46 = tpu.matmul %43, %45, %cst_34 {dimension_numbers = #tpu.dot_dimension_numbers<[1], [0], [0], [1], [0, 0, 1, 1], [], []>} : vector<8x64xbf16>, vector<64x256xbf16>, vector<8x256xf32> -> vector<8x256xf32>
    %47 = vector.broadcast %44 : vector<8x1xf32> to vector<8x256xf32>
    %48 = arith.addf %46, %47 : vector<8x256xf32>
    %c0_35 = arith.constant 0 : index
    %c0_36 = arith.constant 0 : index
    %49 = vector.load %arg16[%c0_35, %c0_36] : memref<8x256xf32, #tpu.memory_space<vmem>>, vector<8x256xf32>
    tpu.vector_store %arg16[%c0_35, %c0_36], %48 {strides = array<i32>} : memref<8x256xf32, #tpu.memory_space<vmem>>, vector<8x256xf32>,
    return
  }
  func.func @transform_0(%arg0: i32) -> (i32, i32) {
    %c0_i32 = arith.constant 0 : i32
    %c0_i32_0 = arith.constant 0 : i32
    return %c0_i32, %arg0 : i32, i32
  }
  func.func @transform_1(%arg0: i32) -> (i32, i32) {
    %c0_i32 = arith.constant 0 : i32
    %c0_i32_0 = arith.constant 0 : i32
    %c0_i32_1 = arith.constant 0 : i32
    return %c0_i32, %c0_i32_0 : i32, i32
  }
  func.func @transform_2(%arg0: i32) -> (i32, i32) {
    %c0_i32 = arith.constant 0 : i32
    %c0_i32_0 = arith.constant 0 : i32
    %c0_i32_1 = arith.constant 0 : i32
    return %c0_i32, %c0_i32_0 : i32, i32
  }
  func.func @transform_3(%arg0: i32) -> (i32, i32) {
    %c0_i32 = arith.constant 0 : i32
    %c0_i32_0 = arith.constant 0 : i32
    %c0_i32_1 = arith.constant 0 : i32
    return %c0_i32, %c0_i32_0 : i32, i32
  }
  func.func @transform_4(%arg0: i32) -> (i32, i32) {
    %c0_i32 = arith.constant 0 : i32
    %c0_i32_0 = arith.constant 0 : i32
    %c0_i32_1 = arith.constant 0 : i32
    return %c0_i32, %c0_i32_0 : i32, i32
  }
  func.func @transform_5(%arg0: i32) -> (i32, i32) {
    %c0_i32 = arith.constant 0 : i32
    %c0_i32_0 = arith.constant 0 : i32
    %c0_i32_1 = arith.constant 0 : i32
    return %c0_i32, %c0_i32_0 : i32, i32
  }
  func.func @transform_6(%arg0: i32) -> (i32, i32) {
    %c0_i32 = arith.constant 0 : i32
    %c0_i32_0 = arith.constant 0 : i32
    %c0_i32_1 = arith.constant 0 : i32
    return %c0_i32, %c0_i32_0 : i32, i32
  }
  func.func @transform_7(%arg0: i32) -> (i32, i32) {
    %c0_i32 = arith.constant 0 : i32
    %c0_i32_0 = arith.constant 0 : i32
    %c0_i32_1 = arith.constant 0 : i32
    return %c0_i32, %c0_i32_0 : i32, i32
  }
  func.func @transform_8(%arg0: i32) -> (i32, i32) {
    %c0_i32 = arith.constant 0 : i32
    %c0_i32_0 = arith.constant 0 : i32
    %c0_i32_1 = arith.constant 0 : i32
    return %c0_i32, %c0_i32_0 : i32, i32
  }
  func.func @transform_9(%arg0: i32) -> (i32, i32) {
    %c0_i32 = arith.constant 0 : i32
    %c0_i32_0 = arith.constant 0 : i32
    %c0_i32_1 = arith.constant 0 : i32
    return %c0_i32, %c0_i32_0 : i32, i32
  }
  func.func @transform_10(%arg0: i32) -> (i32, i32) {
    %c0_i32 = arith.constant 0 : i32
    %c0_i32_0 = arith.constant 0 : i32
    %c0_i32_1 = arith.constant 0 : i32
    return %c0_i32, %c0_i32_0 : i32, i32
  }
  func.func @transform_11(%arg0: i32) -> (i32, i32) {
    %c0_i32 = arith.constant 0 : i32
    %c0_i32_0 = arith.constant 0 : i32
    %c0_i32_1 = arith.constant 0 : i32
    return %c0_i32, %c0_i32_0 : i32, i32
  }
  func.func @transform_12(%arg0: i32) -> (i32, i32) {
    %c0_i32 = arith.constant 0 : i32
    %c0_i32_0 = arith.constant 0 : i32
    %c0_i32_1 = arith.constant 0 : i32
    return %c0_i32, %c0_i32_0 : i32, i32
  }
  func.func @transform_13(%arg0: i32) -> (i32, i32) {
    %c0_i32 = arith.constant 0 : i32
    %c0_i32_0 = arith.constant 0 : i32
    %c0_i32_1 = arith.constant 0 : i32
    return %c0_i32, %c0_i32_0 : i32, i32
  }
  func.func @transform_14(%arg0: i32) -> (i32, i32) {
    %c0_i32 = arith.constant 0 : i32
    %c0_i32_0 = arith.constant 0 : i32
    %c0_i32_1 = arith.constant 0 : i32
    return %c0_i32, %c0_i32_0 : i32, i32
  }
  func.func @transform_15(%arg0: i32) -> (i32, i32) {
    %c0_i32 = arith.constant 0 : i32
    %c0_i32_0 = arith.constant 0 : i32
    return %c0_i32, %arg0 : i32, i32
  }
}

</mosaic_0001>

<llo_original>
// kernel: neural_network_forward.1
$region0: #{neural_network_forward.1}
  #allocation0 [shape = 'u32[]', space=smem, size = 0x4, offset = 0x4, fixed_abs, tag = 'smem constant byte address 0x4 - core index']
  #allocation1 [shape = 'u32[72,128]{1,0:T(1,128)}', space=vmem, size = 0x9000, scoped, tag = 'internal scratch']
  %s0 = inlined_call_operand.vmem [shape: f32[8,512], index: 0, kind: input, shape index: {}]
  %s1 = inlined_call_operand.vmem [shape: bf16[64,8], index: 1, kind: input, shape index: {}]
  %s2 = inlined_call_operand.vmem [shape: f32[64,1], index: 2, kind: input, shape index: {}]
  %s3 = inlined_call_operand.vmem [shape: bf16[64,64], index: 3, kind: input, shape index: {}]
  %s4 = inlined_call_operand.vmem [shape: f32[64,1], index: 4, kind: input, shape index: {}]
  %s5 = inlined_call_operand.vmem [shape: bf16[64,64], index: 5, kind: input, shape index: {}]
  %s6 = inlined_call_operand.vmem [shape: f32[64,1], index: 6, kind: input, shape index: {}]
  %s7 = inlined_call_operand.vmem [shape: bf16[64,64], index: 7, kind: input, shape index: {}]
  %s8 = inlined_call_operand.vmem [shape: f32[64,1], index: 8, kind: input, shape index: {}]
  %s9 = inlined_call_operand.vmem [shape: bf16[64,64], index: 9, kind: input, shape index: {}]
  %s10 = inlined_call_operand.vmem [shape: f32[64,1], index: 10, kind: input, shape index: {}]
  %s11 = inlined_call_operand.vmem [shape: bf16[64,64], index: 11, kind: input, shape index: {}]
  %s12 = inlined_call_operand.vmem [shape: f32[64,1], index: 12, kind: input, shape index: {}]
  %s13 = inlined_call_operand.vmem [shape: bf16[8,64], index: 13, kind: input, shape index: {}]
  %s14 = inlined_call_operand.vmem [shape: f32[8,1], index: 14, kind: input, shape index: {}]
  %s15 = inlined_call_operand.vmem [shape: f32[8,512], index: 15, kind: output, shape index: {}]
  %s16 = sld [smem:[#allocation0]]
  $region93: #{neural_network_forward.1} parent=0
    _
  %s18 = ssub.s32 1, %s16
  %s19 = scalar_select 0, %s18, %s16
  loop: start=0, step=1, limit=4
  $region2: #{neural_network_forward.1} parent=0 // loop_pre_header
    _
  $region3: #{neural_network_forward.1} parent=0 // loop_header
    %s21 = sphi 0, %s25
    %p22 = scmp.ge.s32.totalorder %s21, 4
    %s31 = sphi 0, %s33
    %s34 = sphi 0, %s31
    %s35 = sphi 0, %s34
    %s51 = sphi 0, %s35
    %s55 = sphi 0, %s55
    %s57 = sphi 0, %s55
    %s58 = sphi 0, %s57
    %s72 = sphi 0, %s58
    %s76 = sphi 0, %s76
    %s78 = sphi 0, %s76
    %s79 = sphi 0, %s78
    %s93 = sphi 0, %s79
    %s97 = sphi 0, %s97
    %s99 = sphi 0, %s97
    %s100 = sphi 0, %s99
    %s114 = sphi 0, %s100
    %s118 = sphi 0, %s118
    %s120 = sphi 0, %s118
    %s121 = sphi 0, %s120
    %s135 = sphi 0, %s121
    %s139 = sphi 0, %s139
    %s141 = sphi 0, %s139
    %s142 = sphi 0, %s141
    %s156 = sphi 0, %s142
    %s160 = sphi 0, %s160
    %s162 = sphi 0, %s160
    %s163 = sphi 0, %s162
    %s177 = sphi 0, %s163
    %s181 = sphi 0, %s181
    %s183 = sphi 0, %s181
    %s184 = sphi 0, %s183
    %s198 = sphi 0, %s184
    %s202 = sphi 0, %s202
    %s204 = sphi 0, %s202
    %s205 = sphi 0, %s204
    %s219 = sphi 0, %s205
    %s223 = sphi 0, %s223
    %s225 = sphi 0, %s223
    %s226 = sphi 0, %s225
    %s240 = sphi 0, %s226
    %s244 = sphi 0, %s244
    %s246 = sphi 0, %s244
    %s247 = sphi 0, %s246
    %s261 = sphi 0, %s247
    %s265 = sphi 0, %s265
    %s267 = sphi 0, %s265
    %s268 = sphi 0, %s267
    %s282 = sphi 0, %s268
    %s286 = sphi 0, %s286
    %s288 = sphi 0, %s286
    %s289 = sphi 0, %s288
    %s303 = sphi 0, %s289
    %s307 = sphi 0, %s307
    %s309 = sphi 0, %s307
    %s310 = sphi 0, %s309
    %s324 = sphi 0, %s310
    %s328 = sphi 0, %s328
    %s330 = sphi 0, %s328
    %s331 = sphi 0, %s330
    %s345 = sphi 0, %s331
    %s351 = sphi 0, %s353
    %s354 = sphi 0, %s351
    %s355 = sphi 0, %s354
    %s371 = sphi 0, %s355
  $region4: #{neural_network_forward.1} parent=0 // loop_header_branch
    %24 = sbr.rel (%p22) target = $region8
  $region5: #{neural_network_forward.1} parent=0 // loop_body
    %s26 = ssub.s32 %s21, 1
    %s27 = ssub.s32 %s21, 2
    %s28 = sadd.s32 %s21, 1
    %s29 = ssub.s32 %s21, %s28
    %p30 = scmp.eq.s32.totalorder %s29, 0
    %s32 = sadd.s32 %s31, 1
    %s33 = scalar_select %p30, %s31, %s32
    %p36 = pneg %p30
    %p37 = scmp.eq.s32.totalorder %s21, 1
    %p38 = por %p36, %p37
    %p39 = scmp.ne.s32.totalorder %s31, %s34
    %p40 = scmp.eq.s32.totalorder %s21, 0
    %p41 = por %p39, %p40
    %p42 = scmp.ne.s32.totalorder %s31, %s34
    %p43 = scmp.eq.s32.totalorder %s26, 1
    %p44 = por %p42, %p43
    %p45 = scmp.ne.s32.totalorder %s34, %s35
    %p46 = scmp.eq.s32.totalorder %s26, 0
    %p47 = por %p45, %p46
    %p48 = scmp.ne.s32.totalorder %s34, %s35
    %p49 = scmp.eq.s32.totalorder %s27, 1
    %p50 = por %p48, %p49
    %p52 = scmp.ne.s32.totalorder %s35, %s51
    %p53 = scmp.eq.s32.totalorder %s27, 0
    %p54 = por %p52, %p53
    %s56 = sadd.s32 %s55, 1
    %p59 = scmp.eq.s32.totalorder %s21, 1
    %p60 = scmp.ne.s32.totalorder %s55, %s57
    %p61 = scmp.eq.s32.totalorder %s21, 0
    %p62 = por %p60, %p61
    %p63 = scmp.ne.s32.totalorder %s55, %s57
    %p64 = scmp.eq.s32.totalorder %s26, 1
    %p65 = por %p63, %p64
    %p66 = scmp.ne.s32.totalorder %s57, %s58
    %p67 = scmp.eq.s32.totalorder %s26, 0
    %p68 = por %p66, %p67
    %p69 = scmp.ne.s32.totalorder %s57, %s58
    %p70 = scmp.eq.s32.totalorder %s27, 1
    %p71 = por %p69, %p70
    %p73 = scmp.ne.s32.totalorder %s58, %s72
    %p74 = scmp.eq.s32.totalorder %s27, 0
    %p75 = por %p73, %p74
    %s77 = sadd.s32 %s76, 1
    %p80 = scmp.eq.s32.totalorder %s21, 1
    %p81 = scmp.ne.s32.totalorder %s76, %s78
    %p82 = scmp.eq.s32.totalorder %s21, 0
    %p83 = por %p81, %p82
    %p84 = scmp.ne.s32.totalorder %s76, %s78
    %p85 = scmp.eq.s32.totalorder %s26, 1
    %p86 = por %p84, %p85
    %p87 = scmp.ne.s32.totalorder %s78, %s79
    %p88 = scmp.eq.s32.totalorder %s26, 0
    %p89 = por %p87, %p88
    %p90 = scmp.ne.s32.totalorder %s78, %s79
    %p91 = scmp.eq.s32.totalorder %s27, 1
    %p92 = por %p90, %p91
    %p94 = scmp.ne.s32.totalorder %s79, %s93
    %p95 = scmp.eq.s32.totalorder %s27, 0
    %p96 = por %p94, %p95
    %s98 = sadd.s32 %s97, 1
    %p101 = scmp.eq.s32.totalorder %s21, 1
    %p102 = scmp.ne.s32.totalorder %s97, %s99
    %p103 = scmp.eq.s32.totalorder %s21, 0
    %p104 = por %p102, %p103
    %p105 = scmp.ne.s32.totalorder %s97, %s99
    %p106 = scmp.eq.s32.totalorder %s26, 1
    %p107 = por %p105, %p106
    %p108 = scmp.ne.s32.totalorder %s99, %s100
    %p109 = scmp.eq.s32.totalorder %s26, 0
    %p110 = por %p108, %p109
    %p111 = scmp.ne.s32.totalorder %s99, %s100
    %p112 = scmp.eq.s32.totalorder %s27, 1
    %p113 = por %p111, %p112
    %p115 = scmp.ne.s32.totalorder %s100, %s114
    %p116 = scmp.eq.s32.totalorder %s27, 0
    %p117 = por %p115, %p116
    %s119 = sadd.s32 %s118, 1
    %p122 = scmp.eq.s32.totalorder %s21, 1
    %p123 = scmp.ne.s32.totalorder %s118, %s120
    %p124 = scmp.eq.s32.totalorder %s21, 0
    %p125 = por %p123, %p124
    %p126 = scmp.ne.s32.totalorder %s118, %s120
    %p127 = scmp.eq.s32.totalorder %s26, 1
    %p128 = por %p126, %p127
    %p129 = scmp.ne.s32.totalorder %s120, %s121
    %p130 = scmp.eq.s32.totalorder %s26, 0
    %p131 = por %p129, %p130
    %p132 = scmp.ne.s32.totalorder %s120, %s121
    %p133 = scmp.eq.s32.totalorder %s27, 1
    %p134 = por %p132, %p133
    %p136 = scmp.ne.s32.totalorder %s121, %s135
    %p137 = scmp.eq.s32.totalorder %s27, 0
    %p138 = por %p136, %p137
    %s140 = sadd.s32 %s139, 1
    %p143 = scmp.eq.s32.totalorder %s21, 1
    %p144 = scmp.ne.s32.totalorder %s139, %s141
    %p145 = scmp.eq.s32.totalorder %s21, 0
    %p146 = por %p144, %p145
    %p147 = scmp.ne.s32.totalorder %s139, %s141
    %p148 = scmp.eq.s32.totalorder %s26, 1
    %p149 = por %p147, %p148
    %p150 = scmp.ne.s32.totalorder %s141, %s142
    %p151 = scmp.eq.s32.totalorder %s26, 0
    %p152 = por %p150, %p151
    %p153 = scmp.ne.s32.totalorder %s141, %s142
    %p154 = scmp.eq.s32.totalorder %s27, 1
    %p155 = por %p153, %p154
    %p157 = scmp.ne.s32.totalorder %s142, %s156
    %p158 = scmp.eq.s32.totalorder %s27, 0
    %p159 = por %p157, %p158
    %s161 = sadd.s32 %s160, 1
    %p164 = scmp.eq.s32.totalorder %s21, 1
    %p165 = scmp.ne.s32.totalorder %s160, %s162
    %p166 = scmp.eq.s32.totalorder %s21, 0
    %p167 = por %p165, %p166
    %p168 = scmp.ne.s32.totalorder %s160, %s162
    %p169 = scmp.eq.s32.totalorder %s26, 1
    %p170 = por %p168, %p169
    %p171 = scmp.ne.s32.totalorder %s162, %s163
    %p172 = scmp.eq.s32.totalorder %s26, 0
    %p173 = por %p171, %p172
    %p174 = scmp.ne.s32.totalorder %s162, %s163
    %p175 = scmp.eq.s32.totalorder %s27, 1
    %p176 = por %p174, %p175
    %p178 = scmp.ne.s32.totalorder %s163, %s177
    %p179 = scmp.eq.s32.totalorder %s27, 0
    %p180 = por %p178, %p179
    %s182 = sadd.s32 %s181, 1
    %p185 = scmp.eq.s32.totalorder %s21, 1
    %p186 = scmp.ne.s32.totalorder %s181, %s183
    %p187 = scmp.eq.s32.totalorder %s21, 0
    %p188 = por %p186, %p187
    %p189 = scmp.ne.s32.totalorder %s181, %s183
    %p190 = scmp.eq.s32.totalorder %s26, 1
    %p191 = por %p189, %p190
    %p192 = scmp.ne.s32.totalorder %s183, %s184
    %p193 = scmp.eq.s32.totalorder %s26, 0
    %p194 = por %p192, %p193
    %p195 = scmp.ne.s32.totalorder %s183, %s184
    %p196 = scmp.eq.s32.totalorder %s27, 1
    %p197 = por %p195, %p196
    %p199 = scmp.ne.s32.totalorder %s184, %s198
    %p200 = scmp.eq.s32.totalorder %s27, 0
    %p201 = por %p199, %p200
    %s203 = sadd.s32 %s202, 1
    %p206 = scmp.eq.s32.totalorder %s21, 1
    %p207 = scmp.ne.s32.totalorder %s202, %s204
    %p208 = scmp.eq.s32.totalorder %s21, 0
    %p209 = por %p207, %p208
    %p210 = scmp.ne.s32.totalorder %s202, %s204
    %p211 = scmp.eq.s32.totalorder %s26, 1
    %p212 = por %p210, %p211
    %p213 = scmp.ne.s32.totalorder %s204, %s205
    %p214 = scmp.eq.s32.totalorder %s26, 0
    %p215 = por %p213, %p214
    %p216 = scmp.ne.s32.totalorder %s204, %s205
    %p217 = scmp.eq.s32.totalorder %s27, 1
    %p218 = por %p216, %p217
    %p220 = scmp.ne.s32.totalorder %s205, %s219
    %p221 = scmp.eq.s32.totalorder %s27, 0
    %p222 = por %p220, %p221
    %s224 = sadd.s32 %s223, 1
    %p227 = scmp.eq.s32.totalorder %s21, 1
    %p228 = scmp.ne.s32.totalorder %s223, %s225
    %p229 = scmp.eq.s32.totalorder %s21, 0
    %p230 = por %p228, %p229
    %p231 = scmp.ne.s32.totalorder %s223, %s225
    %p232 = scmp.eq.s32.totalorder %s26, 1
    %p233 = por %p231, %p232
    %p234 = scmp.ne.s32.totalorder %s225, %s226
    %p235 = scmp.eq.s32.totalorder %s26, 0
    %p236 = por %p234, %p235
    %p237 = scmp.ne.s32.totalorder %s225, %s226
    %p238 = scmp.eq.s32.totalorder %s27, 1
    %p239 = por %p237, %p238
    %p241 = scmp.ne.s32.totalorder %s226, %s240
    %p242 = scmp.eq.s32.totalorder %s27, 0
    %p243 = por %p241, %p242
    %s245 = sadd.s32 %s244, 1
    %p248 = scmp.eq.s32.totalorder %s21, 1
    %p249 = scmp.ne.s32.totalorder %s244, %s246
    %p250 = scmp.eq.s32.totalorder %s21, 0
    %p251 = por %p249, %p250
    %p252 = scmp.ne.s32.totalorder %s244, %s246
    %p253 = scmp.eq.s32.totalorder %s26, 1
    %p254 = por %p252, %p253
    %p255 = scmp.ne.s32.totalorder %s246, %s247
    %p256 = scmp.eq.s32.totalorder %s26, 0
    %p257 = por %p255, %p256
    %p258 = scmp.ne.s32.totalorder %s246, %s247
    %p259 = scmp.eq.s32.totalorder %s27, 1
    %p260 = por %p258, %p259
    %p262 = scmp.ne.s32.totalorder %s247, %s261
    %p263 = scmp.eq.s32.totalorder %s27, 0
    %p264 = por %p262, %p263
    %s266 = sadd.s32 %s265, 1
    %p269 = scmp.eq.s32.totalorder %s21, 1
    %p270 = scmp.ne.s32.totalorder %s265, %s267
    %p271 = scmp.eq.s32.totalorder %s21, 0
    %p272 = por %p270, %p271
    %p273 = scmp.ne.s32.totalorder %s265, %s267
    %p274 = scmp.eq.s32.totalorder %s26, 1
    %p275 = por %p273, %p274
    %p276 = scmp.ne.s32.totalorder %s267, %s268
    %p277 = scmp.eq.s32.totalorder %s26, 0
    %p278 = por %p276, %p277
    %p279 = scmp.ne.s32.totalorder %s267, %s268
    %p280 = scmp.eq.s32.totalorder %s27, 1
    %p281 = por %p279, %p280
    %p283 = scmp.ne.s32.totalorder %s268, %s282
    %p284 = scmp.eq.s32.totalorder %s27, 0
    %p285 = por %p283, %p284
    %s287 = sadd.s32 %s286, 1
    %p290 = scmp.eq.s32.totalorder %s21, 1
    %p291 = scmp.ne.s32.totalorder %s286, %s288
    %p292 = scmp.eq.s32.totalorder %s21, 0
    %p293 = por %p291, %p292
    %p294 = scmp.ne.s32.totalorder %s286, %s288
    %p295 = scmp.eq.s32.totalorder %s26, 1
    %p296 = por %p294, %p295
    %p297 = scmp.ne.s32.totalorder %s288, %s289
    %p298 = scmp.eq.s32.totalorder %s26, 0
    %p299 = por %p297, %p298
    %p300 = scmp.ne.s32.totalorder %s288, %s289
    %p301 = scmp.eq.s32.totalorder %s27, 1
    %p302 = por %p300, %p301
    %p304 = scmp.ne.s32.totalorder %s289, %s303
    %p305 = scmp.eq.s32.totalorder %s27, 0
    %p306 = por %p304, %p305
    %s308 = sadd.s32 %s307, 1
    %p311 = scmp.eq.s32.totalorder %s21, 1
    %p312 = scmp.ne.s32.totalorder %s307, %s309
    %p313 = scmp.eq.s32.totalorder %s21, 0
    %p314 = por %p312, %p313
    %p315 = scmp.ne.s32.totalorder %s307, %s309
    %p316 = scmp.eq.s32.totalorder %s26, 1
    %p317 = por %p315, %p316
    %p318 = scmp.ne.s32.totalorder %s309, %s310
    %p319 = scmp.eq.s32.totalorder %s26, 0
    %p320 = por %p318, %p319
    %p321 = scmp.ne.s32.totalorder %s309, %s310
    %p322 = scmp.eq.s32.totalorder %s27, 1
    %p323 = por %p321, %p322
    %p325 = scmp.ne.s32.totalorder %s310, %s324
    %p326 = scmp.eq.s32.totalorder %s27, 0
    %p327 = por %p325, %p326
    %s329 = sadd.s32 %s328, 1
    %p332 = scmp.eq.s32.totalorder %s21, 1
    %p333 = scmp.ne.s32.totalorder %s328, %s330
    %p334 = scmp.eq.s32.totalorder %s21, 0
    %p335 = por %p333, %p334
    %p336 = scmp.ne.s32.totalorder %s328, %s330
    %p337 = scmp.eq.s32.totalorder %s26, 1
    %p338 = por %p336, %p337
    %p339 = scmp.ne.s32.totalorder %s330, %s331
    %p340 = scmp.eq.s32.totalorder %s26, 0
    %p341 = por %p339, %p340
    %p342 = scmp.ne.s32.totalorder %s330, %s331
    %p343 = scmp.eq.s32.totalorder %s27, 1
    %p344 = por %p342, %p343
    %p346 = scmp.ne.s32.totalorder %s331, %s345
    %p347 = scmp.eq.s32.totalorder %s27, 0
    %p348 = por %p346, %p347
    %s349 = ssub.s32 %s21, %s28
    %p350 = scmp.eq.s32.totalorder %s349, 0
    %s352 = sadd.s32 %s351, 1
    %s353 = scalar_select %p350, %s351, %s352
    %p356 = pneg %p350
    %p357 = scmp.eq.s32.totalorder %s21, 1
    %p358 = por %p356, %p357
    %p359 = scmp.ne.s32.totalorder %s351, %s354
    %p360 = scmp.eq.s32.totalorder %s21, 0
    %p361 = por %p359, %p360
    %p362 = scmp.ne.s32.totalorder %s351, %s354
    %p363 = scmp.eq.s32.totalorder %s26, 1
    %p364 = por %p362, %p363
    %p365 = scmp.ne.s32.totalorder %s354, %s355
    %p366 = scmp.eq.s32.totalorder %s26, 0
    %p367 = por %p365, %p366
    %p368 = scmp.ne.s32.totalorder %s354, %s355
    %p369 = scmp.eq.s32.totalorder %s27, 1
    %p370 = por %p368, %p369
    %p372 = scmp.ne.s32.totalorder %s355, %s371
    %p373 = scmp.eq.s32.totalorder %s27, 0
    %p374 = por %p372, %p373
    %p375 = scmp.le.s32.totalorder 1, %s21
    %p376 = scmp.lt.s32.totalorder %s21, 3
    %p377 = pnand %p375, %p376
    %p378 = pneg %p377
    // Predicated region
    $region9: #{neural_network_forward.1} parent=5 // pred_check
      _
    $region10: #{neural_network_forward.1} parent=5 // pred_check_branch
      %380 = sbr.rel (%p377) target = $region12
    $region11: #{neural_network_forward.1} parent=5 // pred_region
      %s381 = ssub.s32 %s21, 1
      // Predicated region
      $region13: #{neural_network_forward.1} parent=11 // pred_check
        %p382 = pneg %p68
      $region14: #{neural_network_forward.1} parent=11 // pred_check_branch
        %384 = sbr.rel (%p382) target = $region16
      $region15: #{neural_network_forward.1} parent=11 // pred_region
        _
      $region16: #{neural_network_forward.1} parent=11 // pred_fallthru
        _
      // Predicated region
      $region17: #{neural_network_forward.1} parent=11 // pred_check
        %p385 = pneg %p89
      $region18: #{neural_network_forward.1} parent=11 // pred_check_branch
        %387 = sbr.rel (%p385) target = $region20
      $region19: #{neural_network_forward.1} parent=11 // pred_region
        _
      $region20: #{neural_network_forward.1} parent=11 // pred_fallthru
        _
      // Predicated region
      $region21: #{neural_network_forward.1} parent=11 // pred_check
        %p388 = pneg %p110
      $region22: #{neural_network_forward.1} parent=11 // pred_check_branch
        %390 = sbr.rel (%p388) target = $region24
      $region23: #{neural_network_forward.1} parent=11 // pred_region
        _
      $region24: #{neural_network_forward.1} parent=11 // pred_fallthru
        _
      // Predicated region
      $region25: #{neural_network_forward.1} parent=11 // pred_check
        %p391 = pneg %p131
      $region26: #{neural_network_forward.1} parent=11 // pred_check_branch
        %393 = sbr.rel (%p391) target = $region28
      $region27: #{neural_network_forward.1} parent=11 // pred_region
        _
      $region28: #{neural_network_forward.1} parent=11 // pred_fallthru
        _
      // Predicated region
      $region29: #{neural_network_forward.1} parent=11 // pred_check
        %p394 = pneg %p152
      $region30: #{neural_network_forward.1} parent=11 // pred_check_branch
        %396 = sbr.rel (%p394) target = $region32
      $region31: #{neural_network_forward.1} parent=11 // pred_region
        _
      $region32: #{neural_network_forward.1} parent=11 // pred_fallthru
        _
      // Predicated region
      $region33: #{neural_network_forward.1} parent=11 // pred_check
        %p397 = pneg %p173
      $region34: #{neural_network_forward.1} parent=11 // pred_check_branch
        %399 = sbr.rel (%p397) target = $region36
      $region35: #{neural_network_forward.1} parent=11 // pred_region
        _
      $region36: #{neural_network_forward.1} parent=11 // pred_fallthru
        _
      // Predicated region
      $region37: #{neural_network_forward.1} parent=11 // pred_check
        %p400 = pneg %p194
      $region38: #{neural_network_forward.1} parent=11 // pred_check_branch
        %402 = sbr.rel (%p400) target = $region40
      $region39: #{neural_network_forward.1} parent=11 // pred_region
        _
      $region40: #{neural_network_forward.1} parent=11 // pred_fallthru
        _
      // Predicated region
      $region41: #{neural_network_forward.1} parent=11 // pred_check
        %p403 = pneg %p215
      $region42: #{neural_network_forward.1} parent=11 // pred_check_branch
        %405 = sbr.rel (%p403) target = $region44
      $region43: #{neural_network_forward.1} parent=11 // pred_region
        _
      $region44: #{neural_network_forward.1} parent=11 // pred_fallthru
        _
      // Predicated region
      $region45: #{neural_network_forward.1} parent=11 // pred_check
        %p406 = pneg %p236
      $region46: #{neural_network_forward.1} parent=11 // pred_check_branch
        %408 = sbr.rel (%p406) target = $region48
      $region47: #{neural_network_forward.1} parent=11 // pred_region
        _
      $region48: #{neural_network_forward.1} parent=11 // pred_fallthru
        _
      // Predicated region
      $region49: #{neural_network_forward.1} parent=11 // pred_check
        %p409 = pneg %p257
      $region50: #{neural_network_forward.1} parent=11 // pred_check_branch
        %411 = sbr.rel (%p409) target = $region52
      $region51: #{neural_network_forward.1} parent=11 // pred_region
        _
      $region52: #{neural_network_forward.1} parent=11 // pred_fallthru
        _
      // Predicated region
      $region53: #{neural_network_forward.1} parent=11 // pred_check
        %p412 = pneg %p278
      $region54: #{neural_network_forward.1} parent=11 // pred_check_branch
        %414 = sbr.rel (%p412) target = $region56
      $region55: #{neural_network_forward.1} parent=11 // pred_region
        _
      $region56: #{neural_network_forward.1} parent=11 // pred_fallthru
        _
      // Predicated region
      $region57: #{neural_network_forward.1} parent=11 // pred_check
        %p415 = pneg %p299
      $region58: #{neural_network_forward.1} parent=11 // pred_check_branch
        %417 = sbr.rel (%p415) target = $region60
      $region59: #{neural_network_forward.1} parent=11 // pred_region
        _
      $region60: #{neural_network_forward.1} parent=11 // pred_fallthru
        _
      // Predicated region
      $region61: #{neural_network_forward.1} parent=11 // pred_check
        %p418 = pneg %p320
      $region62: #{neural_network_forward.1} parent=11 // pred_check_branch
        %420 = sbr.rel (%p418) target = $region64
      $region63: #{neural_network_forward.1} parent=11 // pred_region
        _
      $region64: #{neural_network_forward.1} parent=11 // pred_fallthru
        _
      // Predicated region
      $region65: #{neural_network_forward.1} parent=11 // pred_check
        %p421 = pneg %p341
      $region66: #{neural_network_forward.1} parent=11 // pred_check_branch
        %423 = sbr.rel (%p421) target = $region68
      $region67: #{neural_network_forward.1} parent=11 // pred_region
        _
      $region68: #{neural_network_forward.1} parent=11 // pred_fallthru
        _
    $region12: #{neural_network_forward.1} parent=5 // pred_fallthru
      _
    %p424 = scmp.lt.s32.totalorder %s21, 2
    // Predicated region
    $region69: #{neural_network_forward.1} parent=5 // pred_check
      %p425 = pneg %p424
    $region70: #{neural_network_forward.1} parent=5 // pred_check_branch
      %427 = sbr.rel (%p425) target = $region72
    $region71: #{neural_network_forward.1} parent=5 // pred_region
      // Predicated region
      $region73: #{neural_network_forward.1} parent=71 // pred_check
        %p428 = pneg %p41
      $region74: #{neural_network_forward.1} parent=71 // pred_check_branch
        %430 = sbr.rel (%p428) target = $region76
      $region75: #{neural_network_forward.1} parent=71 // pred_region
        %s431 = smul.u32 2, %s21
        %p432 = scmp.lt.s32.totalorder %s431, 3
        %s433 = scalar_select %p432, %s431, 3
        %s434 = smul.addr %s433, 8
        %s435 = scalar_lea.vmem %s0, %s434
        %s436 = smul.u32 2, %s21
      $region76: #{neural_network_forward.1} parent=71 // pred_fallthru
        _
    $region72: #{neural_network_forward.1} parent=5 // pred_fallthru
      _
    %p437 = scmp.le.s32.totalorder 1, %s21
    %p438 = scmp.lt.s32.totalorder %s21, 3
    %p439 = pnand %p437, %p438
    %p440 = pneg %p439
    // Predicated region
    $region77: #{neural_network_forward.1} parent=5 // pred_check
      _
    $region78: #{neural_network_forward.1} parent=5 // pred_check_branch
      %442 = sbr.rel (%p439) target = $region80
    $region79: #{neural_network_forward.1} parent=5 // pred_region
      %s443 = ssub.s32 %s21, 1
      %s444 = smul.u32 2, %s26
      %p445 = scmp.lt.s32.totalorder %s444, 3
      %s446 = scalar_select %p445, %s444, 3
      %s447 = smul.addr %s446, 8
      %s448 = scalar_lea.vmem %s0, %s447
      %p449 = pneg %p47
      %p450 = pneg %p44
      %p451 = pneg %p68
      %p452 = pneg %p65
      %p453 = pneg %p89
      %p454 = pneg %p86
      %p455 = pneg %p110
      %p456 = pneg %p107
      %p457 = pneg %p131
      %p458 = pneg %p128
      %p459 = pneg %p152
      %p460 = pneg %p149
      %p461 = pneg %p173
      %p462 = pneg %p170
      %p463 = pneg %p194
      %p464 = pneg %p191
      %p465 = pneg %p215
      %p466 = pneg %p212
      %p467 = pneg %p236
      %p468 = pneg %p233
      %p469 = pneg %p257
      %p470 = pneg %p254
      %p471 = pneg %p278
      %p472 = pneg %p275
      %p473 = pneg %p299
      %p474 = pneg %p296
      %p475 = pneg %p320
      %p476 = pneg %p317
      %p477 = pneg %p341
      %p478 = pneg %p338
      %p479 = pneg %p367
      %p480 = pneg %p364
      %s481 = smul.u32 2, %s26
      %p482 = scmp.lt.s32.totalorder %s481, 3
      %s483 = scalar_select %p482, %s481, 3
      %s484 = smul.addr %s483, 8
      %s485 = scalar_lea.vmem %s15, %s484
      %s486 = smul.u32 2, %s26
      %p487 = scmp.lt.s32.totalorder %s486, 3
      %s488 = scalar_select %p487, %s486, 3
      %s489 = smul.addr %s488, 8
      %s490 = scalar_lea.vmem %s0, %s489
      %s491 = smul.u32 2, %s26
      %s492 = smul.u32 2, %s26
      %p493 = scmp.lt.s32.totalorder %s492, 3
      %s494 = scalar_select %p493, %s492, 3
      %s495 = smul.addr %s494, 8
      %s496 = scalar_lea.vmem %s15, %s495
      %s497 = smul.u32 2, %s26
      %v499 = vld [vmem:[%s490] sm:$0xff]
      %v500 = vld [vmem:[%s490 + $0x8] sm:$0xff]
      %v501 = vld [vmem:[%s1] sm:$0xf]
      %v502 = vld [vmem:[%s1 + $0x4] sm:$0xf]
      %v503 = vld [vmem:[%s1 + $0x8] sm:$0xf]
      %v504 = vld [vmem:[%s1 + $0xc] sm:$0xf]
      %v505 = vld [vmem:[%s1 + $0x10] sm:$0xf]
      %v506 = vld [vmem:[%s1 + $0x14] sm:$0xf]
      %v507 = vld [vmem:[%s1 + $0x18] sm:$0xf]
      %v508 = vld [vmem:[%s1 + $0x1c] sm:$0xf]
      %v509 = vld [vmem:[%s2] sm:$0xff]
      %v510 = vld [vmem:[%s2 + $0x8] sm:$0xff]
      %v511 = vld [vmem:[%s2 + $0x10] sm:$0xff]
      %v512 = vld [vmem:[%s2 + $0x18] sm:$0xff]
      %v513 = vld [vmem:[%s2 + $0x20] sm:$0xff]
      %v514 = vld [vmem:[%s2 + $0x28] sm:$0xff]
      %v515 = vld [vmem:[%s2 + $0x30] sm:$0xff]
      %v516 = vld [vmem:[%s2 + $0x38] sm:$0xff]
      %v517 = vpack.c.bf16 %v499, %v499
      %v518 = vpack.c.bf16 %v500, %v500
      %520 = vset.pattern.permute.xlu0 0
      %521 = vperm.xlu0 %520, %v509
      %v522 = vpop.permute.xlu0 %521
      %525 = vset.pattern.permute.xlu0 0
      %526 = vperm.xlu0 %525, %v510
      %v527 = vpop.permute.xlu0 %526
      %530 = vset.pattern.permute.xlu0 0
      %531 = vperm.xlu0 %530, %v511
      %v532 = vpop.permute.xlu0 %531
      %535 = vset.pattern.permute.xlu0 0
      %536 = vperm.xlu0 %535, %v512
      %v537 = vpop.permute.xlu0 %536
      %540 = vset.pattern.permute.xlu0 0
      %541 = vperm.xlu0 %540, %v513
      %v542 = vpop.permute.xlu0 %541
      %545 = vset.pattern.permute.xlu0 0
      %546 = vperm.xlu0 %545, %v514
      %v547 = vpop.permute.xlu0 %546
      %550 = vset.pattern.permute.xlu0 0
      %551 = vperm.xlu0 %550, %v515
      %v552 = vpop.permute.xlu0 %551
      %555 = vset.pattern.permute.xlu0 0
      %556 = vperm.xlu0 %555, %v516
      %v557 = vpop.permute.xlu0 %556
      %v567 = vunpack.c.l.b16 %v501
      %v568 = vunpack.c.l.b16 %v502
      %v569 = vunpack.c.l.b16 %v503
      %v570 = vunpack.c.l.b16 %v504
      %v571 = vunpack.c.l.b16 %v505
      %v572 = vunpack.c.l.b16 %v506
      %v573 = vunpack.c.l.b16 %v507
      %v574 = vunpack.c.l.b16 %v508
      %v575 = vpack.c.b16 %v568, %v567
      %v576 = vpack.c.b16 %v570, %v569
      %v577 = vpack.c.b16 %v572, %v571
      %v578 = vpack.c.b16 %v574, %v573
      %vm579 = vcmask 64512
      %v581 = vsel %vm579, %v575, 0
      %v584 = vsel %vm579, %v576, 0
      %v587 = vsel %vm579, %v577, 0
      %v590 = vsel %vm579, %v578, 0
      %vm592 = vcmask 1043456
      %v594 = vsel %vm592, %v517, 0
      %v597 = vsel %vm592, %v518, 0
      %599 = vmatpush.bf16.msra.mxu0 0
      %600 = vmatpush.bf16.msra.mxu0 0
      %601 = vmatpush.bf16.msra.mxu0 0
      %602 = vmatpush.bf16.msra.mxu0 0
      %603 = vmatpush.bf16.msra.mxu0 0
      %604 = vmatpush.bf16.msra.mxu0 0
      %605 = vmatpush.bf16.msra.mxu0 0
      %606 = vmatpush.bf16.msra.mxu0 %v594
      %607 = vmatmul.bf16.gmra.mxu0 %v581
      %v608 = vpop.f32.mrf.mxu0
      %v609 = vadd.f32 %v522, %v608
      %v610 = vpop.f32.mrf.mxu0
      %v611 = vadd.f32 %v527, %v610
      %612 = vmatmul.bf16.gmra.mxu0 %v584
      %v613 = vpop.f32.mrf.mxu0
      %v614 = vadd.f32 %v532, %v613
      %v615 = vpop.f32.mrf.mxu0
      %v616 = vadd.f32 %v537, %v615
      %617 = vmatmul.bf16.gmra.mxu0 %v587
      %v618 = vpop.f32.mrf.mxu0
      %v619 = vadd.f32 %v542, %v618
      %v620 = vpop.f32.mrf.mxu0
      %v621 = vadd.f32 %v547, %v620
      %622 = vmatmul.bf16.gmra.mxu0 %v590
      %v623 = vpop.f32.mrf.mxu0
      %v624 = vadd.f32 %v552, %v623
      %v625 = vpop.f32.mrf.mxu0
      %v626 = vadd.f32 %v557, %v625
      %627 = vdwg.mxu0
      %628 = vmatpush.bf16.msra.mxu0 0
      %629 = vmatpush.bf16.msra.mxu0 0
      %630 = vmatpush.bf16.msra.mxu0 0
      %631 = vmatpush.bf16.msra.mxu0 0
      %632 = vmatpush.bf16.msra.mxu0 0
      %633 = vmatpush.bf16.msra.mxu0 0
      %634 = vmatpush.bf16.msra.mxu0 0
      %635 = vmatpush.bf16.msra.mxu0 %v597
      %636 = vmatmul.bf16.gmra.mxu0 %v581
      %v637 = vpop.f32.mrf.mxu0
      %v638 = vadd.f32 %v522, %v637
      %v639 = vpop.f32.mrf.mxu0
      %v640 = vadd.f32 %v527, %v639
      %641 = vmatmul.bf16.gmra.mxu0 %v584
      %v642 = vpop.f32.mrf.mxu0
      %v643 = vadd.f32 %v532, %v642
      %v644 = vpop.f32.mrf.mxu0
      %v645 = vadd.f32 %v537, %v644
      %646 = vmatmul.bf16.gmra.mxu0 %v587
      %v647 = vpop.f32.mrf.mxu0
      %v648 = vadd.f32 %v542, %v647
      %v649 = vpop.f32.mrf.mxu0
      %v650 = vadd.f32 %v547, %v649
      %651 = vmatmul.bf16.gmra.mxu0 %v590
      %v652 = vpop.f32.mrf.mxu0
      %v653 = vadd.f32 %v552, %v652
      %v654 = vpop.f32.mrf.mxu0
      %v655 = vadd.f32 %v557, %v654
      %656 = vdwg.mxu0
      %v657 = vtanh.pop %v609
      %v658 = vtanh.pop %v638
      %v659 = vtanh.pop %v611
      %v660 = vtanh.pop %v640
      %v661 = vtanh.pop %v614
      %v662 = vtanh.pop %v643
      %v663 = vtanh.pop %v616
      %v664 = vtanh.pop %v645
      %v665 = vtanh.pop %v619
      %v666 = vtanh.pop %v648
      %v667 = vtanh.pop %v621
      %v668 = vtanh.pop %v650
      %v669 = vtanh.pop %v624
      %v670 = vtanh.pop %v653
      %v671 = vtanh.pop %v626
      %v672 = vtanh.pop %v655
      %v673 = vld [vmem:[%s3] sm:$0xf]
      %v674 = vld [vmem:[%s3 + $0x4] sm:$0xf]
      %v675 = vld [vmem:[%s3 + $0x8] sm:$0xf]
      %v676 = vld [vmem:[%s3 + $0xc] sm:$0xf]
      %v677 = vld [vmem:[%s3 + $0x10] sm:$0xf]
      %v678 = vld [vmem:[%s3 + $0x14] sm:$0xf]
      %v679 = vld [vmem:[%s3 + $0x18] sm:$0xf]
      %v680 = vld [vmem:[%s3 + $0x1c] sm:$0xf]
      %v681 = vld [vmem:[%s4] sm:$0xff]
      %v682 = vld [vmem:[%s4 + $0x8] sm:$0xff]
      %v683 = vld [vmem:[%s4 + $0x10] sm:$0xff]
      %v684 = vld [vmem:[%s4 + $0x18] sm:$0xff]
      %v685 = vld [vmem:[%s4 + $0x20] sm:$0xff]
      %v686 = vld [vmem:[%s4 + $0x28] sm:$0xff]
      %v687 = vld [vmem:[%s4 + $0x30] sm:$0xff]
      %v688 = vld [vmem:[%s4 + $0x38] sm:$0xff]
      %v689 = vpack.c.bf16 %v659, %v657
      %v690 = vpack.c.bf16 %v660, %v658
      %v691 = vpack.c.bf16 %v663, %v661
      %v692 = vpack.c.bf16 %v664, %v662
      %v693 = vpack.c.bf16 %v667, %v665
      %v694 = vpack.c.bf16 %v668, %v666
      %v695 = vpack.c.bf16 %v671, %v669
      %v696 = vpack.c.bf16 %v672, %v670
      %698 = vset.pattern.permute.xlu0 0
      %699 = vperm.xlu0 %698, %v681
      %v700 = vpop.permute.xlu0 %699
      %703 = vset.pattern.permute.xlu0 0
      %704 = vperm.xlu0 %703, %v682
      %v705 = vpop.permute.xlu0 %704
      %708 = vset.pattern.permute.xlu0 0
      %709 = vperm.xlu0 %708, %v683
      %v710 = vpop.permute.xlu0 %709
      %713 = vset.pattern.permute.xlu0 0
      %714 = vperm.xlu0 %713, %v684
      %v715 = vpop.permute.xlu0 %714
      %718 = vset.pattern.permute.xlu0 0
      %719 = vperm.xlu0 %718, %v685
      %v720 = vpop.permute.xlu0 %719
      %723 = vset.pattern.permute.xlu0 0
      %724 = vperm.xlu0 %723, %v686
      %v725 = vpop.permute.xlu0 %724
      %728 = vset.pattern.permute.xlu0 0
      %729 = vperm.xlu0 %728, %v687
      %v730 = vpop.permute.xlu0 %729
      %733 = vset.pattern.permute.xlu0 0
      %734 = vperm.xlu0 %733, %v688
      %v735 = vpop.permute.xlu0 %734
      %v745 = vunpack.c.l.b16 %v673
      %v746 = vunpack.c.l.b16 %v674
      %v747 = vunpack.c.l.b16 %v675
      %v748 = vunpack.c.l.b16 %v676
      %v749 = vunpack.c.l.b16 %v677
      %v750 = vunpack.c.l.b16 %v678
      %v751 = vunpack.c.l.b16 %v679
      %v752 = vunpack.c.l.b16 %v680
      %v753 = vpack.c.b16 %v746, %v745
      %v754 = vpack.c.b16 %v748, %v747
      %v755 = vpack.c.b16 %v750, %v749
      %v756 = vpack.c.b16 %v752, %v751
      %vm757 = vcmask 523264
      %v759 = vsel %vm757, %v753, 0
      %v762 = vsel %vm757, %v754, 0
      %v765 = vsel %vm757, %v755, 0
      %v768 = vsel %vm757, %v756, 0
      %770 = vmatpush.bf16.msra.mxu0 0
      %771 = vmatpush.bf16.msra.mxu0 0
      %772 = vmatpush.bf16.msra.mxu0 0
      %773 = vmatpush.bf16.msra.mxu0 0
      %774 = vmatpush.bf16.msra.mxu0 %v695
      %775 = vmatpush.bf16.msra.mxu0 %v693
      %776 = vmatpush.bf16.msra.mxu0 %v691
      %777 = vmatpush.bf16.msra.mxu0 %v689
      %778 = vmatmul.bf16.gmra.mxu0 %v759
      %v779 = vpop.f32.mrf.mxu0
      %v780 = vadd.f32 %v700, %v779
      %v781 = vpop.f32.mrf.mxu0
      %v782 = vadd.f32 %v705, %v781
      %783 = vmatmul.bf16.gmra.mxu0 %v762
      %v784 = vpop.f32.mrf.mxu0
      %v785 = vadd.f32 %v710, %v784
      %v786 = vpop.f32.mrf.mxu0
      %v787 = vadd.f32 %v715, %v786
      %788 = vmatmul.bf16.gmra.mxu0 %v765
      %v789 = vpop.f32.mrf.mxu0
      %v790 = vadd.f32 %v720, %v789
      %v791 = vpop.f32.mrf.mxu0
      %v792 = vadd.f32 %v725, %v791
      %793 = vmatmul.bf16.gmra.mxu0 %v768
      %v794 = vpop.f32.mrf.mxu0
      %v795 = vadd.f32 %v730, %v794
      %v796 = vpop.f32.mrf.mxu0
      %v797 = vadd.f32 %v735, %v796
      %798 = vdwg.mxu0
      %799 = vmatpush.bf16.msra.mxu0 0
      %800 = vmatpush.bf16.msra.mxu0 0
      %801 = vmatpush.bf16.msra.mxu0 0
      %802 = vmatpush.bf16.msra.mxu0 0
      %803 = vmatpush.bf16.msra.mxu0 %v696
      %804 = vmatpush.bf16.msra.mxu0 %v694
      %805 = vmatpush.bf16.msra.mxu0 %v692
      %806 = vmatpush.bf16.msra.mxu0 %v690
      %807 = vmatmul.bf16.gmra.mxu0 %v759
      %v808 = vpop.f32.mrf.mxu0
      %v809 = vadd.f32 %v700, %v808
      %v810 = vpop.f32.mrf.mxu0
      %v811 = vadd.f32 %v705, %v810
      %812 = vmatmul.bf16.gmra.mxu0 %v762
      %v813 = vpop.f32.mrf.mxu0
      %v814 = vadd.f32 %v710, %v813
      %v815 = vpop.f32.mrf.mxu0
      %v816 = vadd.f32 %v715, %v815
      %817 = vmatmul.bf16.gmra.mxu0 %v765
      %v818 = vpop.f32.mrf.mxu0
      %v819 = vadd.f32 %v720, %v818
      %v820 = vpop.f32.mrf.mxu0
      %v821 = vadd.f32 %v725, %v820
      %822 = vmatmul.bf16.gmra.mxu0 %v768
      %v823 = vpop.f32.mrf.mxu0
      %v824 = vadd.f32 %v730, %v823
      %v825 = vpop.f32.mrf.mxu0
      %v826 = vadd.f32 %v735, %v825
      %827 = vdwg.mxu0
      %v828 = vtanh.pop %v780
      %v829 = vtanh.pop %v809
      %v830 = vtanh.pop %v782
      %v831 = vtanh.pop %v811
      %v832 = vtanh.pop %v785
      %v833 = vtanh.pop %v814
      %v834 = vtanh.pop %v787
      %v835 = vtanh.pop %v816
      %v836 = vtanh.pop %v790
      %v837 = vtanh.pop %v819
      %v838 = vtanh.pop %v792
      %v839 = vtanh.pop %v821
      %v840 = vtanh.pop %v795
      %v841 = vtanh.pop %v824
      %v842 = vtanh.pop %v797
      %v843 = vtanh.pop %v826
      %v844 = vld [vmem:[%s5] sm:$0xf]
      %v845 = vld [vmem:[%s5 + $0x4] sm:$0xf]
      %v846 = vld [vmem:[%s5 + $0x8] sm:$0xf]
      %v847 = vld [vmem:[%s5 + $0xc] sm:$0xf]
      %v848 = vld [vmem:[%s5 + $0x10] sm:$0xf]
      %v849 = vld [vmem:[%s5 + $0x14] sm:$0xf]
      %v850 = vld [vmem:[%s5 + $0x18] sm:$0xf]
      %v851 = vld [vmem:[%s5 + $0x1c] sm:$0xf]
      %v852 = vld [vmem:[%s6] sm:$0xff]
      %v853 = vld [vmem:[%s6 + $0x8] sm:$0xff]
      %v854 = vld [vmem:[%s6 + $0x10] sm:$0xff]
      %v855 = vld [vmem:[%s6 + $0x18] sm:$0xff]
      %v856 = vld [vmem:[%s6 + $0x20] sm:$0xff]
      %v857 = vld [vmem:[%s6 + $0x28] sm:$0xff]
      %v858 = vld [vmem:[%s6 + $0x30] sm:$0xff]
      %v859 = vld [vmem:[%s6 + $0x38] sm:$0xff]
      %v860 = vpack.c.bf16 %v830, %v828
      %v861 = vpack.c.bf16 %v831, %v829
      %v862 = vpack.c.bf16 %v834, %v832
      %v863 = vpack.c.bf16 %v835, %v833
      %v864 = vpack.c.bf16 %v838, %v836
      %v865 = vpack.c.bf16 %v839, %v837
      %v866 = vpack.c.bf16 %v842, %v840
      %v867 = vpack.c.bf16 %v843, %v841
      %869 = vset.pattern.permute.xlu0 0
      %870 = vperm.xlu0 %869, %v852
      %v871 = vpop.permute.xlu0 %870
      %874 = vset.pattern.permute.xlu0 0
      %875 = vperm.xlu0 %874, %v853
      %v876 = vpop.permute.xlu0 %875
      %879 = vset.pattern.permute.xlu0 0
      %880 = vperm.xlu0 %879, %v854
      %v881 = vpop.permute.xlu0 %880
      %884 = vset.pattern.permute.xlu0 0
      %885 = vperm.xlu0 %884, %v855
      %v886 = vpop.permute.xlu0 %885
      %889 = vset.pattern.permute.xlu0 0
      %890 = vperm.xlu0 %889, %v856
      %v891 = vpop.permute.xlu0 %890
      %894 = vset.pattern.permute.xlu0 0
      %895 = vperm.xlu0 %894, %v857
      %v896 = vpop.permute.xlu0 %895
      %899 = vset.pattern.permute.xlu0 0
      %900 = vperm.xlu0 %899, %v858
      %v901 = vpop.permute.xlu0 %900
      %904 = vset.pattern.permute.xlu0 0
      %905 = vperm.xlu0 %904, %v859
      %v906 = vpop.permute.xlu0 %905
      %v916 = vunpack.c.l.b16 %v844
      %v917 = vunpack.c.l.b16 %v845
      %v918 = vunpack.c.l.b16 %v846
      %v919 = vunpack.c.l.b16 %v847
      %v920 = vunpack.c.l.b16 %v848
      %v921 = vunpack.c.l.b16 %v849
      %v922 = vunpack.c.l.b16 %v850
      %v923 = vunpack.c.l.b16 %v851
      %v924 = vpack.c.b16 %v917, %v916
      %v925 = vpack.c.b16 %v919, %v918
      %v926 = vpack.c.b16 %v921, %v920
      %v927 = vpack.c.b16 %v923, %v922
      %v929 = vsel %vm757, %v924, 0
      %v932 = vsel %vm757, %v925, 0
      %v935 = vsel %vm757, %v926, 0
      %v938 = vsel %vm757, %v927, 0
      %940 = vmatpush.bf16.msra.mxu0 0
      %941 = vmatpush.bf16.msra.mxu0 0
      %942 = vmatpush.bf16.msra.mxu0 0
      %943 = vmatpush.bf16.msra.mxu0 0
      %944 = vmatpush.bf16.msra.mxu0 %v866
      %945 = vmatpush.bf16.msra.mxu0 %v864
      %946 = vmatpush.bf16.msra.mxu0 %v862
      %947 = vmatpush.bf16.msra.mxu0 %v860
      %948 = vmatmul.bf16.gmra.mxu0 %v929
      %v949 = vpop.f32.mrf.mxu0
      %v950 = vadd.f32 %v871, %v949
      %v951 = vpop.f32.mrf.mxu0
      %v952 = vadd.f32 %v876, %v951
      %953 = vmatmul.bf16.gmra.mxu0 %v932
      %v954 = vpop.f32.mrf.mxu0
      %v955 = vadd.f32 %v881, %v954
      %v956 = vpop.f32.mrf.mxu0
      %v957 = vadd.f32 %v886, %v956
      %958 = vmatmul.bf16.gmra.mxu0 %v935
      %v959 = vpop.f32.mrf.mxu0
      %v960 = vadd.f32 %v891, %v959
      %v961 = vpop.f32.mrf.mxu0
      %v962 = vadd.f32 %v896, %v961
      %963 = vmatmul.bf16.gmra.mxu0 %v938
      %v964 = vpop.f32.mrf.mxu0
      %v965 = vadd.f32 %v901, %v964
      %v966 = vpop.f32.mrf.mxu0
      %v967 = vadd.f32 %v906, %v966
      %968 = vdwg.mxu0
      %969 = vmatpush.bf16.msra.mxu0 0
      %970 = vmatpush.bf16.msra.mxu0 0
      %971 = vmatpush.bf16.msra.mxu0 0
      %972 = vmatpush.bf16.msra.mxu0 0
      %973 = vmatpush.bf16.msra.mxu0 %v867
      %974 = vmatpush.bf16.msra.mxu0 %v865
      %975 = vmatpush.bf16.msra.mxu0 %v863
      %976 = vmatpush.bf16.msra.mxu0 %v861
      %977 = vmatmul.bf16.gmra.mxu0 %v929
      %v978 = vpop.f32.mrf.mxu0
      %v979 = vadd.f32 %v871, %v978
      %v980 = vpop.f32.mrf.mxu0
      %v981 = vadd.f32 %v876, %v980
      %982 = vmatmul.bf16.gmra.mxu0 %v932
      %v983 = vpop.f32.mrf.mxu0
      %v984 = vadd.f32 %v881, %v983
      %v985 = vpop.f32.mrf.mxu0
      %v986 = vadd.f32 %v886, %v985
      %987 = vmatmul.bf16.gmra.mxu0 %v935
      %v988 = vpop.f32.mrf.mxu0
      %v989 = vadd.f32 %v891, %v988
      %v990 = vpop.f32.mrf.mxu0
      %v991 = vadd.f32 %v896, %v990
      %992 = vmatmul.bf16.gmra.mxu0 %v938
      %v993 = vpop.f32.mrf.mxu0
      %v994 = vadd.f32 %v901, %v993
      %v995 = vpop.f32.mrf.mxu0
      %v996 = vadd.f32 %v906, %v995
      %997 = vdwg.mxu0
      %v998 = vtanh.pop %v950
      %v999 = vtanh.pop %v979
      %v1000 = vtanh.pop %v952
      %v1001 = vtanh.pop %v981
      %v1002 = vtanh.pop %v955
      %v1003 = vtanh.pop %v984
      %v1004 = vtanh.pop %v957
      %v1005 = vtanh.pop %v986
      %v1006 = vtanh.pop %v960
      %v1007 = vtanh.pop %v989
      %v1008 = vtanh.pop %v962
      %v1009 = vtanh.pop %v991
      %v1010 = vtanh.pop %v965
      %v1011 = vtanh.pop %v994
      %v1012 = vtanh.pop %v967
      %v1013 = vtanh.pop %v996
      %v1014 = vld [vmem:[%s7] sm:$0xf]
      %v1015 = vld [vmem:[%s7 + $0x4] sm:$0xf]
      %v1016 = vld [vmem:[%s7 + $0x8] sm:$0xf]
      %v1017 = vld [vmem:[%s7 + $0xc] sm:$0xf]
      %v1018 = vld [vmem:[%s7 + $0x10] sm:$0xf]
      %v1019 = vld [vmem:[%s7 + $0x14] sm:$0xf]
      %v1020 = vld [vmem:[%s7 + $0x18] sm:$0xf]
      %v1021 = vld [vmem:[%s7 + $0x1c] sm:$0xf]
      %v1022 = vld [vmem:[%s8] sm:$0xff]
      %v1023 = vld [vmem:[%s8 + $0x8] sm:$0xff]
      %v1024 = vld [vmem:[%s8 + $0x10] sm:$0xff]
      %v1025 = vld [vmem:[%s8 + $0x18] sm:$0xff]
      %v1026 = vld [vmem:[%s8 + $0x20] sm:$0xff]
      %v1027 = vld [vmem:[%s8 + $0x28] sm:$0xff]
      %v1028 = vld [vmem:[%s8 + $0x30] sm:$0xff]
      %v1029 = vld [vmem:[%s8 + $0x38] sm:$0xff]
      %v1030 = vpack.c.bf16 %v1000, %v998
      %v1031 = vpack.c.bf16 %v1001, %v999
      %v1032 = vpack.c.bf16 %v1004, %v1002
      %v1033 = vpack.c.bf16 %v1005, %v1003
      %v1034 = vpack.c.bf16 %v1008, %v1006
      %v1035 = vpack.c.bf16 %v1009, %v1007
      %v1036 = vpack.c.bf16 %v1012, %v1010
      %v1037 = vpack.c.bf16 %v1013, %v1011
      %1039 = vset.pattern.permute.xlu0 0
      %1040 = vperm.xlu0 %1039, %v1022
      %v1041 = vpop.permute.xlu0 %1040
      %1044 = vset.pattern.permute.xlu0 0
      %1045 = vperm.xlu0 %1044, %v1023
      %v1046 = vpop.permute.xlu0 %1045
      %1049 = vset.pattern.permute.xlu0 0
      %1050 = vperm.xlu0 %1049, %v1024
      %v1051 = vpop.permute.xlu0 %1050
      %1054 = vset.pattern.permute.xlu0 0
      %1055 = vperm.xlu0 %1054, %v1025
      %v1056 = vpop.permute.xlu0 %1055
      %1059 = vset.pattern.permute.xlu0 0
      %1060 = vperm.xlu0 %1059, %v1026
      %v1061 = vpop.permute.xlu0 %1060
      %1064 = vset.pattern.permute.xlu0 0
      %1065 = vperm.xlu0 %1064, %v1027
      %v1066 = vpop.permute.xlu0 %1065
      %1069 = vset.pattern.permute.xlu0 0
      %1070 = vperm.xlu0 %1069, %v1028
      %v1071 = vpop.permute.xlu0 %1070
      %1074 = vset.pattern.permute.xlu0 0
      %1075 = vperm.xlu0 %1074, %v1029
      %v1076 = vpop.permute.xlu0 %1075
      %v1086 = vunpack.c.l.b16 %v1014
      %v1087 = vunpack.c.l.b16 %v1015
      %v1088 = vunpack.c.l.b16 %v1016
      %v1089 = vunpack.c.l.b16 %v1017
      %v1090 = vunpack.c.l.b16 %v1018
      %v1091 = vunpack.c.l.b16 %v1019
      %v1092 = vunpack.c.l.b16 %v1020
      %v1093 = vunpack.c.l.b16 %v1021
      %v1094 = vpack.c.b16 %v1087, %v1086
      %v1095 = vpack.c.b16 %v1089, %v1088
      %v1096 = vpack.c.b16 %v1091, %v1090
      %v1097 = vpack.c.b16 %v1093, %v1092
      %v1099 = vsel %vm757, %v1094, 0
      %v1102 = vsel %vm757, %v1095, 0
      %v1105 = vsel %vm757, %v1096, 0
      %v1108 = vsel %vm757, %v1097, 0
      %1110 = vmatpush.bf16.msra.mxu0 0
      %1111 = vmatpush.bf16.msra.mxu0 0
      %1112 = vmatpush.bf16.msra.mxu0 0
      %1113 = vmatpush.bf16.msra.mxu0 0
      %1114 = vmatpush.bf16.msra.mxu0 %v1036
      %1115 = vmatpush.bf16.msra.mxu0 %v1034
      %1116 = vmatpush.bf16.msra.mxu0 %v1032
      %1117 = vmatpush.bf16.msra.mxu0 %v1030
      %1118 = vmatmul.bf16.gmra.mxu0 %v1099
      %v1119 = vpop.f32.mrf.mxu0
      %v1120 = vadd.f32 %v1041, %v1119
      %v1121 = vpop.f32.mrf.mxu0
      %v1122 = vadd.f32 %v1046, %v1121
      %1123 = vmatmul.bf16.gmra.mxu0 %v1102
      %v1124 = vpop.f32.mrf.mxu0
      %v1125 = vadd.f32 %v1051, %v1124
      %v1126 = vpop.f32.mrf.mxu0
      %v1127 = vadd.f32 %v1056, %v1126
      %1128 = vmatmul.bf16.gmra.mxu0 %v1105
      %v1129 = vpop.f32.mrf.mxu0
      %v1130 = vadd.f32 %v1061, %v1129
      %v1131 = vpop.f32.mrf.mxu0
      %v1132 = vadd.f32 %v1066, %v1131
      %1133 = vmatmul.bf16.gmra.mxu0 %v1108
      %v1134 = vpop.f32.mrf.mxu0
      %v1135 = vadd.f32 %v1071, %v1134
      %v1136 = vpop.f32.mrf.mxu0
      %v1137 = vadd.f32 %v1076, %v1136
      %1138 = vdwg.mxu0
      %1139 = vmatpush.bf16.msra.mxu0 0
      %1140 = vmatpush.bf16.msra.mxu0 0
      %1141 = vmatpush.bf16.msra.mxu0 0
      %1142 = vmatpush.bf16.msra.mxu0 0
      %1143 = vmatpush.bf16.msra.mxu0 %v1037
      %1144 = vmatpush.bf16.msra.mxu0 %v1035
      %1145 = vmatpush.bf16.msra.mxu0 %v1033
      %1146 = vmatpush.bf16.msra.mxu0 %v1031
      %1147 = vmatmul.bf16.gmra.mxu0 %v1099
      %v1148 = vpop.f32.mrf.mxu0
      %v1149 = vadd.f32 %v1041, %v1148
      %v1150 = vpop.f32.mrf.mxu0
      %v1151 = vadd.f32 %v1046, %v1150
      %1152 = vmatmul.bf16.gmra.mxu0 %v1102
      %v1153 = vpop.f32.mrf.mxu0
      %v1154 = vadd.f32 %v1051, %v1153
      %v1155 = vpop.f32.mrf.mxu0
      %v1156 = vadd.f32 %v1056, %v1155
      %1157 = vmatmul.bf16.gmra.mxu0 %v1105
      %v1158 = vpop.f32.mrf.mxu0
      %v1159 = vadd.f32 %v1061, %v1158
      %v1160 = vpop.f32.mrf.mxu0
      %v1161 = vadd.f32 %v1066, %v1160
      %1162 = vmatmul.bf16.gmra.mxu0 %v1108
      %v1163 = vpop.f32.mrf.mxu0
      %v1164 = vadd.f32 %v1071, %v1163
      %v1165 = vpop.f32.mrf.mxu0
      %v1166 = vadd.f32 %v1076, %v1165
      %1167 = vdwg.mxu0
      %v1168 = vtanh.pop %v1120
      %v1169 = vtanh.pop %v1149
      %v1170 = vtanh.pop %v1122
      %v1171 = vtanh.pop %v1151
      %v1172 = vtanh.pop %v1125
      %v1173 = vtanh.pop %v1154
      %v1174 = vtanh.pop %v1127
      %v1175 = vtanh.pop %v1156
      %v1176 = vtanh.pop %v1130
      %v1177 = vtanh.pop %v1159
      %v1178 = vtanh.pop %v1132
      %v1179 = vtanh.pop %v1161
      %v1180 = vtanh.pop %v1135
      %v1181 = vtanh.pop %v1164
      %v1182 = vtanh.pop %v1137
      %v1183 = vtanh.pop %v1166
      %v1184 = vld [vmem:[%s9] sm:$0xf]
      %v1185 = vld [vmem:[%s9 + $0x4] sm:$0xf]
      %v1186 = vld [vmem:[%s9 + $0x8] sm:$0xf]
      %v1187 = vld [vmem:[%s9 + $0xc] sm:$0xf]
      %v1188 = vld [vmem:[%s9 + $0x10] sm:$0xf]
      %v1189 = vld [vmem:[%s9 + $0x14] sm:$0xf]
      %v1190 = vld [vmem:[%s9 + $0x18] sm:$0xf]
      %v1191 = vld [vmem:[%s9 + $0x1c] sm:$0xf]
      %v1192 = vld [vmem:[%s10] sm:$0xff]
      %v1193 = vld [vmem:[%s10 + $0x8] sm:$0xff]
      %v1194 = vld [vmem:[%s10 + $0x10] sm:$0xff]
      %v1195 = vld [vmem:[%s10 + $0x18] sm:$0xff]
      %v1196 = vld [vmem:[%s10 + $0x20] sm:$0xff]
      %v1197 = vld [vmem:[%s10 + $0x28] sm:$0xff]
      %v1198 = vld [vmem:[%s10 + $0x30] sm:$0xff]
      %v1199 = vld [vmem:[%s10 + $0x38] sm:$0xff]
      %v1200 = vpack.c.bf16 %v1170, %v1168
      %v1201 = vpack.c.bf16 %v1171, %v1169
      %v1202 = vpack.c.bf16 %v1174, %v1172
      %v1203 = vpack.c.bf16 %v1175, %v1173
      %v1204 = vpack.c.bf16 %v1178, %v1176
      %v1205 = vpack.c.bf16 %v1179, %v1177
      %v1206 = vpack.c.bf16 %v1182, %v1180
      %v1207 = vpack.c.bf16 %v1183, %v1181
      %1209 = vset.pattern.permute.xlu0 0
      %1210 = vperm.xlu0 %1209, %v1192
      %v1211 = vpop.permute.xlu0 %1210
      %1214 = vset.pattern.permute.xlu0 0
      %1215 = vperm.xlu0 %1214, %v1193
      %v1216 = vpop.permute.xlu0 %1215
      %1219 = vset.pattern.permute.xlu0 0
      %1220 = vperm.xlu0 %1219, %v1194
      %v1221 = vpop.permute.xlu0 %1220
      %1224 = vset.pattern.permute.xlu0 0
      %1225 = vperm.xlu0 %1224, %v1195
      %v1226 = vpop.permute.xlu0 %1225
      %1229 = vset.pattern.permute.xlu0 0
      %1230 = vperm.xlu0 %1229, %v1196
      %v1231 = vpop.permute.xlu0 %1230
      %1234 = vset.pattern.permute.xlu0 0
      %1235 = vperm.xlu0 %1234, %v1197
      %v1236 = vpop.permute.xlu0 %1235
      %1239 = vset.pattern.permute.xlu0 0
      %1240 = vperm.xlu0 %1239, %v1198
      %v1241 = vpop.permute.xlu0 %1240
      %1244 = vset.pattern.permute.xlu0 0
      %1245 = vperm.xlu0 %1244, %v1199
      %v1246 = vpop.permute.xlu0 %1245
      %v1256 = vunpack.c.l.b16 %v1184
      %v1257 = vunpack.c.l.b16 %v1185
      %v1258 = vunpack.c.l.b16 %v1186
      %v1259 = vunpack.c.l.b16 %v1187
      %v1260 = vunpack.c.l.b16 %v1188
      %v1261 = vunpack.c.l.b16 %v1189
      %v1262 = vunpack.c.l.b16 %v1190
      %v1263 = vunpack.c.l.b16 %v1191
      %v1264 = vpack.c.b16 %v1257, %v1256
      %v1265 = vpack.c.b16 %v1259, %v1258
      %v1266 = vpack.c.b16 %v1261, %v1260
      %v1267 = vpack.c.b16 %v1263, %v1262
      %v1269 = vsel %vm757, %v1264, 0
      %v1272 = vsel %vm757, %v1265, 0
      %v1275 = vsel %vm757, %v1266, 0
      %v1278 = vsel %vm757, %v1267, 0
      %1280 = vmatpush.bf16.msra.mxu0 0
      %1281 = vmatpush.bf16.msra.mxu0 0
      %1282 = vmatpush.bf16.msra.mxu0 0
      %1283 = vmatpush.bf16.msra.mxu0 0
      %1284 = vmatpush.bf16.msra.mxu0 %v1206
      %1285 = vmatpush.bf16.msra.mxu0 %v1204
      %1286 = vmatpush.bf16.msra.mxu0 %v1202
      %1287 = vmatpush.bf16.msra.mxu0 %v1200
      %1288 = vmatmul.bf16.gmra.mxu0 %v1269
      %v1289 = vpop.f32.mrf.mxu0
      %v1290 = vadd.f32 %v1211, %v1289
      %v1291 = vpop.f32.mrf.mxu0
      %v1292 = vadd.f32 %v1216, %v1291
      %1293 = vmatmul.bf16.gmra.mxu0 %v1272
      %v1294 = vpop.f32.mrf.mxu0
      %v1295 = vadd.f32 %v1221, %v1294
      %v1296 = vpop.f32.mrf.mxu0
      %v1297 = vadd.f32 %v1226, %v1296
      %1298 = vmatmul.bf16.gmra.mxu0 %v1275
      %v1299 = vpop.f32.mrf.mxu0
      %v1300 = vadd.f32 %v1231, %v1299
      %v1301 = vpop.f32.mrf.mxu0
      %v1302 = vadd.f32 %v1236, %v1301
      %1303 = vmatmul.bf16.gmra.mxu0 %v1278
      %v1304 = vpop.f32.mrf.mxu0
      %v1305 = vadd.f32 %v1241, %v1304
      %v1306 = vpop.f32.mrf.mxu0
      %v1307 = vadd.f32 %v1246, %v1306
      %1308 = vdwg.mxu0
      %1309 = vmatpush.bf16.msra.mxu0 0
      %1310 = vmatpush.bf16.msra.mxu0 0
      %1311 = vmatpush.bf16.msra.mxu0 0
      %1312 = vmatpush.bf16.msra.mxu0 0
      %1313 = vmatpush.bf16.msra.mxu0 %v1207
      %1314 = vmatpush.bf16.msra.mxu0 %v1205
      %1315 = vmatpush.bf16.msra.mxu0 %v1203
      %1316 = vmatpush.bf16.msra.mxu0 %v1201
      %1317 = vmatmul.bf16.gmra.mxu0 %v1269
      %v1318 = vpop.f32.mrf.mxu0
      %v1319 = vadd.f32 %v1211, %v1318
      %v1320 = vpop.f32.mrf.mxu0
      %v1321 = vadd.f32 %v1216, %v1320
      %1322 = vmatmul.bf16.gmra.mxu0 %v1272
      %v1323 = vpop.f32.mrf.mxu0
      %v1324 = vadd.f32 %v1221, %v1323
      %v1325 = vpop.f32.mrf.mxu0
      %v1326 = vadd.f32 %v1226, %v1325
      %1327 = vmatmul.bf16.gmra.mxu0 %v1275
      %v1328 = vpop.f32.mrf.mxu0
      %v1329 = vadd.f32 %v1231, %v1328
      %v1330 = vpop.f32.mrf.mxu0
      %v1331 = vadd.f32 %v1236, %v1330
      %1332 = vmatmul.bf16.gmra.mxu0 %v1278
      %v1333 = vpop.f32.mrf.mxu0
      %v1334 = vadd.f32 %v1241, %v1333
      %v1335 = vpop.f32.mrf.mxu0
      %v1336 = vadd.f32 %v1246, %v1335
      %1337 = vdwg.mxu0
      %v1338 = vtanh.pop %v1290
      %v1339 = vtanh.pop %v1319
      %v1340 = vtanh.pop %v1292
      %v1341 = vtanh.pop %v1321
      %v1342 = vtanh.pop %v1295
      %v1343 = vtanh.pop %v1324
      %v1344 = vtanh.pop %v1297
      %v1345 = vtanh.pop %v1326
      %v1346 = vtanh.pop %v1300
      %v1347 = vtanh.pop %v1329
      %v1348 = vtanh.pop %v1302
      %v1349 = vtanh.pop %v1331
      %v1350 = vtanh.pop %v1305
      %v1351 = vtanh.pop %v1334
      %v1352 = vtanh.pop %v1307
      %v1353 = vtanh.pop %v1336
      %v1354 = vld [vmem:[%s11] sm:$0xf]
      %v1355 = vld [vmem:[%s11 + $0x4] sm:$0xf]
      %v1356 = vld [vmem:[%s11 + $0x8] sm:$0xf]
      %v1357 = vld [vmem:[%s11 + $0xc] sm:$0xf]
      %v1358 = vld [vmem:[%s11 + $0x10] sm:$0xf]
      %v1359 = vld [vmem:[%s11 + $0x14] sm:$0xf]
      %v1360 = vld [vmem:[%s11 + $0x18] sm:$0xf]
      %v1361 = vld [vmem:[%s11 + $0x1c] sm:$0xf]
      %v1362 = vld [vmem:[%s12] sm:$0xff]
      %v1363 = vld [vmem:[%s12 + $0x8] sm:$0xff]
      %v1364 = vld [vmem:[%s12 + $0x10] sm:$0xff]
      %v1365 = vld [vmem:[%s12 + $0x18] sm:$0xff]
      %v1366 = vld [vmem:[%s12 + $0x20] sm:$0xff]
      %v1367 = vld [vmem:[%s12 + $0x28] sm:$0xff]
      %v1368 = vld [vmem:[%s12 + $0x30] sm:$0xff]
      %v1369 = vld [vmem:[%s12 + $0x38] sm:$0xff]
      %v1370 = vpack.c.bf16 %v1340, %v1338
      %v1371 = vpack.c.bf16 %v1341, %v1339
      %v1372 = vpack.c.bf16 %v1344, %v1342
      %v1373 = vpack.c.bf16 %v1345, %v1343
      %v1374 = vpack.c.bf16 %v1348, %v1346
      %v1375 = vpack.c.bf16 %v1349, %v1347
      %v1376 = vpack.c.bf16 %v1352, %v1350
      %v1377 = vpack.c.bf16 %v1353, %v1351
      %1379 = vset.pattern.permute.xlu0 0
      %1380 = vperm.xlu0 %1379, %v1362
      %v1381 = vpop.permute.xlu0 %1380
      %1384 = vset.pattern.permute.xlu0 0
      %1385 = vperm.xlu0 %1384, %v1363
      %v1386 = vpop.permute.xlu0 %1385
      %1389 = vset.pattern.permute.xlu0 0
      %1390 = vperm.xlu0 %1389, %v1364
      %v1391 = vpop.permute.xlu0 %1390
      %1394 = vset.pattern.permute.xlu0 0
      %1395 = vperm.xlu0 %1394, %v1365
      %v1396 = vpop.permute.xlu0 %1395
      %1399 = vset.pattern.permute.xlu0 0
      %1400 = vperm.xlu0 %1399, %v1366
      %v1401 = vpop.permute.xlu0 %1400
      %1404 = vset.pattern.permute.xlu0 0
      %1405 = vperm.xlu0 %1404, %v1367
      %v1406 = vpop.permute.xlu0 %1405
      %1409 = vset.pattern.permute.xlu0 0
      %1410 = vperm.xlu0 %1409, %v1368
      %v1411 = vpop.permute.xlu0 %1410
      %1414 = vset.pattern.permute.xlu0 0
      %1415 = vperm.xlu0 %1414, %v1369
      %v1416 = vpop.permute.xlu0 %1415
      %v1426 = vunpack.c.l.b16 %v1354
      %v1427 = vunpack.c.l.b16 %v1355
      %v1428 = vunpack.c.l.b16 %v1356
      %v1429 = vunpack.c.l.b16 %v1357
      %v1430 = vunpack.c.l.b16 %v1358
      %v1431 = vunpack.c.l.b16 %v1359
      %v1432 = vunpack.c.l.b16 %v1360
      %v1433 = vunpack.c.l.b16 %v1361
      %v1434 = vpack.c.b16 %v1427, %v1426
      %v1435 = vpack.c.b16 %v1429, %v1428
      %v1436 = vpack.c.b16 %v1431, %v1430
      %v1437 = vpack.c.b16 %v1433, %v1432
      %v1439 = vsel %vm757, %v1434, 0
      %v1442 = vsel %vm757, %v1435, 0
      %v1445 = vsel %vm757, %v1436, 0
      %v1448 = vsel %vm757, %v1437, 0
      %1450 = vmatpush.bf16.msra.mxu0 0
      %1451 = vmatpush.bf16.msra.mxu0 0
      %1452 = vmatpush.bf16.msra.mxu0 0
      %1453 = vmatpush.bf16.msra.mxu0 0
      %1454 = vmatpush.bf16.msra.mxu0 %v1376
      %1455 = vmatpush.bf16.msra.mxu0 %v1374
      %1456 = vmatpush.bf16.msra.mxu0 %v1372
      %1457 = vmatpush.bf16.msra.mxu0 %v1370
      %1458 = vmatmul.bf16.gmra.mxu0 %v1439
      %v1459 = vpop.f32.mrf.mxu0
      %v1460 = vadd.f32 %v1381, %v1459
      %v1461 = vpop.f32.mrf.mxu0
      %v1462 = vadd.f32 %v1386, %v1461
      %1463 = vmatmul.bf16.gmra.mxu0 %v1442
      %v1464 = vpop.f32.mrf.mxu0
      %v1465 = vadd.f32 %v1391, %v1464
      %v1466 = vpop.f32.mrf.mxu0
      %v1467 = vadd.f32 %v1396, %v1466
      %1468 = vmatmul.bf16.gmra.mxu0 %v1445
      %v1469 = vpop.f32.mrf.mxu0
      %v1470 = vadd.f32 %v1401, %v1469
      %v1471 = vpop.f32.mrf.mxu0
      %v1472 = vadd.f32 %v1406, %v1471
      %1473 = vmatmul.bf16.gmra.mxu0 %v1448
      %v1474 = vpop.f32.mrf.mxu0
      %v1475 = vadd.f32 %v1411, %v1474
      %v1476 = vpop.f32.mrf.mxu0
      %v1477 = vadd.f32 %v1416, %v1476
      %1478 = vdwg.mxu0
      %1479 = vmatpush.bf16.msra.mxu0 0
      %1480 = vmatpush.bf16.msra.mxu0 0
      %1481 = vmatpush.bf16.msra.mxu0 0
      %1482 = vmatpush.bf16.msra.mxu0 0
      %1483 = vmatpush.bf16.msra.mxu0 %v1377
      %1484 = vmatpush.bf16.msra.mxu0 %v1375
      %1485 = vmatpush.bf16.msra.mxu0 %v1373
      %1486 = vmatpush.bf16.msra.mxu0 %v1371
      %1487 = vmatmul.bf16.gmra.mxu0 %v1439
      %v1488 = vpop.f32.mrf.mxu0
      %v1489 = vadd.f32 %v1381, %v1488
      %v1490 = vpop.f32.mrf.mxu0
      %v1491 = vadd.f32 %v1386, %v1490
      %1492 = vmatmul.bf16.gmra.mxu0 %v1442
      %v1493 = vpop.f32.mrf.mxu0
      %v1494 = vadd.f32 %v1391, %v1493
      %v1495 = vpop.f32.mrf.mxu0
      %v1496 = vadd.f32 %v1396, %v1495
      %1497 = vmatmul.bf16.gmra.mxu0 %v1445
      %v1498 = vpop.f32.mrf.mxu0
      %v1499 = vadd.f32 %v1401, %v1498
      %v1500 = vpop.f32.mrf.mxu0
      %v1501 = vadd.f32 %v1406, %v1500
      %1502 = vmatmul.bf16.gmra.mxu0 %v1448
      %v1503 = vpop.f32.mrf.mxu0
      %v1504 = vadd.f32 %v1411, %v1503
      %v1505 = vpop.f32.mrf.mxu0
      %v1506 = vadd.f32 %v1416, %v1505
      %1507 = vdwg.mxu0
      %v1508 = vtanh.pop %v1460
      %v1509 = vtanh.pop %v1489
      %v1510 = vtanh.pop %v1462
      %v1511 = vtanh.pop %v1491
      %v1512 = vtanh.pop %v1465
      %v1513 = vtanh.pop %v1494
      %v1514 = vtanh.pop %v1467
      %v1515 = vtanh.pop %v1496
      %v1516 = vtanh.pop %v1470
      %v1517 = vtanh.pop %v1499
      %v1518 = vtanh.pop %v1472
      %v1519 = vtanh.pop %v1501
      %v1520 = vtanh.pop %v1475
      %v1521 = vtanh.pop %v1504
      %v1522 = vtanh.pop %v1477
      %v1523 = vtanh.pop %v1506
      %v1524 = vld [vmem:[%s13] sm:$0xf]
      %v1525 = vld [vmem:[%s14] sm:$0xff]
      %v1526 = vpack.c.bf16 %v1510, %v1508
      %v1527 = vpack.c.bf16 %v1511, %v1509
      %v1528 = vpack.c.bf16 %v1514, %v1512
      %v1529 = vpack.c.bf16 %v1515, %v1513
      %v1530 = vpack.c.bf16 %v1518, %v1516
      %v1531 = vpack.c.bf16 %v1519, %v1517
      %v1532 = vpack.c.bf16 %v1522, %v1520
      %v1533 = vpack.c.bf16 %v1523, %v1521
      %1535 = vset.pattern.permute.xlu0 0
      %1536 = vperm.xlu0 %1535, %v1525
      %v1537 = vpop.permute.xlu0 %1536
      %v1540 = vsel %vm757, %v1524, 0
      %1542 = vmatpush.bf16.msra.mxu0 0
      %1543 = vmatpush.bf16.msra.mxu0 0
      %1544 = vmatpush.bf16.msra.mxu0 0
      %1545 = vmatpush.bf16.msra.mxu0 0
      %1546 = vmatpush.bf16.msra.mxu0 %v1532
      %1547 = vmatpush.bf16.msra.mxu0 %v1530
      %1548 = vmatpush.bf16.msra.mxu0 %v1528
      %1549 = vmatpush.bf16.msra.mxu0 %v1526
      %1550 = vmatmul.bf16.gmra.mxu0 %v1540
      %v1551 = vpop.f32.mrf.mxu0
      %v1552 = vadd.f32 %v1537, %v1551
      %v1553 = vpop.f32.mrf.mxu0
      %1554 = vdwg.mxu0
      %1555 = vmatpush.bf16.msra.mxu0 0
      %1556 = vmatpush.bf16.msra.mxu0 0
      %1557 = vmatpush.bf16.msra.mxu0 0
      %1558 = vmatpush.bf16.msra.mxu0 0
      %1559 = vmatpush.bf16.msra.mxu0 %v1533
      %1560 = vmatpush.bf16.msra.mxu0 %v1531
      %1561 = vmatpush.bf16.msra.mxu0 %v1529
      %1562 = vmatpush.bf16.msra.mxu0 %v1527
      %1563 = vmatmul.bf16.gmra.mxu0 %v1540
      %v1564 = vpop.f32.mrf.mxu0
      %v1565 = vadd.f32 %v1537, %v1564
      %v1566 = vpop.f32.mrf.mxu0
      %1567 = vdwg.mxu0
      %1568 = vst [vmem:[%s496] sm:$0xff] %v1552
      %1569 = vst [vmem:[%s496 + $0x8] sm:$0xff] %v1565
      %s1570 = smul.u32 2, %s26
      %p1571 = scmp.lt.s32.totalorder %s1570, 3
      %s1572 = scalar_select %p1571, %s1570, 3
      %s1573 = smul.addr %s1572, 8
      %s1574 = scalar_lea.vmem %s15, %s1573
      // Predicated region
      $region81: #{neural_network_forward.1} parent=79 // pred_check
        %p1575 = pneg %p364
      $region82: #{neural_network_forward.1} parent=79 // pred_check_branch
        %1577 = sbr.rel (%p1575) target = $region84
      $region83: #{neural_network_forward.1} parent=79 // pred_region
        %s1578 = smul.u32 2, %s26
      $region84: #{neural_network_forward.1} parent=79 // pred_fallthru
        _
    $region80: #{neural_network_forward.1} parent=5 // pred_fallthru
      _
    %p1579 = scmp.le.s32.totalorder 2, %s21
    // Predicated region
    $region85: #{neural_network_forward.1} parent=5 // pred_check
      %p1580 = pneg %p1579
    $region86: #{neural_network_forward.1} parent=5 // pred_check_branch
      %1582 = sbr.rel (%p1580) target = $region88
    $region87: #{neural_network_forward.1} parent=5 // pred_region
      %s1583 = ssub.s32 %s21, 2
      // Predicated region
      $region89: #{neural_network_forward.1} parent=87 // pred_check
        %p1584 = pneg %p370
      $region90: #{neural_network_forward.1} parent=87 // pred_check_branch
        %1586 = sbr.rel (%p1584) target = $region92
      $region91: #{neural_network_forward.1} parent=87 // pred_region
        %s1587 = smul.u32 2, %s27
        %p1588 = scmp.lt.s32.totalorder %s1587, 3
        %s1589 = scalar_select %p1588, %s1587, 3
        %s1590 = smul.addr %s1589, 8
        %s1591 = scalar_lea.vmem %s15, %s1590
      $region92: #{neural_network_forward.1} parent=87 // pred_fallthru
        _
    $region88: #{neural_network_forward.1} parent=5 // pred_fallthru
      _
  $region6: #{neural_network_forward.1} parent=0 // loop_footer
    %s25 = sadd.s32 1, %s21
  $region7: #{neural_network_forward.1} parent=0 // loop_footer_branch
    %20 = sbr.rel target = $region3
  $region8: #{neural_network_forward.1} parent=0 // loop_exit
    _

</llo_original>
